<compile_context>
chip_gen: v6e
topology: v6e:2x2x1
jax: 0.10.0
libtpu: 0.0.40
codegen_flags: <defaults>
</compile_context>

<pallas_src>
import jax
import jax.numpy as jnp
from jax import lax
from jax.experimental import pallas as pl
from jax.experimental.pallas import tpu as pltpu


def lstm_fc_kernel(x_ref, rnn_ref, fc_ref, y_ref, hn_ref, cn_ref, hseq_ref):
    """Single-core kernel: LSTM recurrence + deferred batched FC head.

    x_ref:    (T*Bp, I)    time-major flattened input (row index = t*Bp + b)
    rnn_ref:  (I+1+H, 4H)  packed [Wih^T ; (b_ih+b_hh) ; Whh^T]
    fc_ref:   (H+3, H1)    packed [W1^T ; b1 ; w2_row ; b2_row]
    y_ref:    (Bp, T)      FC output, (batch, time) layout
    hn_ref / cn_ref: (Bp, H) final hidden / cell state
    hseq_ref: (T*Bp, H)    VMEM scratch holding every step's h for the FC head
    """
    Bp, H = hn_ref.shape
    T = y_ref.shape[1]
    H1 = fc_ref.shape[1]
    I = x_ref.shape[1]

    # Static slab views (zero-cost ref slices / single loads).
    wih = rnn_ref[0:I, :]                      # (I, 4H)
    b_row = rnn_ref[I:I + 1, :]                # (1, 4H) = b_ih + b_hh
    whh = rnn_ref[I + 1:I + 1 + H, :]          # (H, 4H)

    # Hoisted input projection + bias for all T: one MXU push.
    gx = jnp.dot(x_ref[...], wih,
                 preferred_element_type=jnp.float32) + b_row   # (T*Bp, 4H)
    # NOTE: gx stays live across the unrolled loop (8 vregs); if a bundle dump
    # ever shows spills, stage it through a VMEM scratch and load per step.

    # Lane mask for the tanh ("g") gate block; hoisted out of the loop.
    lane4h = lax.broadcasted_iota(jnp.int32, (Bp, 4 * H), 1)
    g_mask = (lane4h >= 2 * H) & (lane4h < 3 * H)

    h = jnp.zeros((Bp, H), jnp.float32)
    c = jnp.zeros((Bp, H), jnp.float32)

    # T is small and static: fully unrolled Python loop.  The serial dependent
    # chain per step is: h@whh (MXU) -> one tanh over the 4H gate vreg (EUP)
    # -> VPU gate math -> tanh(c) (EUP).  Everything else is off-chain.
    for t in range(T):
        gates = gx[t * Bp:(t + 1) * Bp, :] + jnp.dot(
            h, whh, preferred_element_type=jnp.float32)        # (Bp, 4H)
        # sigmoid(x) == 0.5*(1 + tanh(x/2)): single tanh pass for all 4 gates.
        tg = jnp.tanh(jnp.where(g_mask, gates, 0.5 * gates))
        act = jnp.where(g_mask, tg, 0.5 * (tg + 1.0))
        i_g = act[:, 0 * H:1 * H]
        f_g = act[:, 1 * H:2 * H]
        g_g = act[:, 2 * H:3 * H]
        o_g = act[:, 3 * H:4 * H]
        c = f_g * c + i_g * g_g
        h = o_g * jnp.tanh(c)
        # Off-chain store of h; consumed by the deferred FC head below.
        hseq_ref[t * Bp:(t + 1) * Bp, :] = h

    hn_ref[...] = h
    cn_ref[...] = c

    # ---- Deferred FC head: one batched matmul over all T*Bp rows ----
    w1 = fc_ref[0:H, :]                        # (H, H1)
    b1 = fc_ref[H:H + 1, :]                    # (1, H1)
    w2_row = fc_ref[H + 1:H + 2, :]            # (1, H1)
    b2 = fc_ref[H + 2:H + 3, 0:1]              # (1, 1)

    hs = hseq_ref[...]                                              # (T*Bp, H)
    z = jnp.maximum(
        jnp.dot(hs, w1, preferred_element_type=jnp.float32) + b1, 0.0)  # (T*Bp, H1)
    # Linear(H1, 1) as VPU multiply + cross-lane reduce (XLU), not an N=1 MXU pass.
    y_col = jnp.sum(z * w2_row, axis=-1, keepdims=True) + b2        # (T*Bp, 1)

    # Repack (time-major column) -> (Bp, T) via select-accumulate and a SINGLE
    # final store (keeps the one vst slot on v5e off the critical path).
    lane_t = lax.broadcasted_iota(jnp.int32, (Bp, T), 1)
    y_acc = jnp.zeros((Bp, T), jnp.float32)
    for t in range(T):
        y_acc = jnp.where(lane_t == t, y_col[t * Bp:(t + 1) * Bp, :], y_acc)
    y_ref[...] = y_acc


# ---------------------------------------------------------------------------
# Wrapper: pack weights once, jit the per-call path.
# ---------------------------------------------------------------------------
def pack_params(params):
    """Pack model weights into two VMEM slabs.  Call ONCE, reuse every forward."""
    H = params['whh'].shape[1]
    H1 = params['w1'].shape[0]
    rnn_slab = jnp.concatenate(
        [params['wih'].T.astype(jnp.float32),                               # (I, 4H)
         (params['b_ih'] + params['b_hh']).reshape(1, 4 * H).astype(jnp.float32),
         params['whh'].T.astype(jnp.float32)],                              # (H, 4H)
        axis=0)                                                             # (I+1+H, 4H)
    fc_slab = jnp.concatenate(
        [params['w1'].T.astype(jnp.float32),                                # (H, H1)
         params['b1'].reshape(1, H1).astype(jnp.float32),
         params['w2'].reshape(1, H1).astype(jnp.float32),
         jnp.broadcast_to(params['b2'].reshape(1, 1), (1, H1)).astype(jnp.float32)],
        axis=0)                                                             # (H+3, H1)
    return rnn_slab, fc_slab


@jax.jit
def rnn_base_model_forward(x, rnn_slab, fc_slab):
    """x: (B, T, I) float32, PyTorch batch_first layout. Returns (y, (h_n, c_n))."""
    B, T, I = x.shape
    H = rnn_slab.shape[1] // 4
    Bp = max(8, ((B + 7) // 8) * 8)            # sublane-pad the batch

    # Zero-pad batch, go time-major, flatten (row index = t*Bp + b).  Fused
    # into the single jitted dispatch.
    xp = jnp.pad(x.astype(jnp.float32), ((0, Bp - B), (0, 0), (0, 0)))
    x_tm = jnp.transpose(xp, (1, 0, 2)).reshape(T * Bp, I)

    vmem = pl.BlockSpec(memory_space=pltpu.MemorySpace.VMEM)
    y_full, h_n, c_n = pl.pallas_call(
        lstm_fc_kernel,
        out_shape=(jax.ShapeDtypeStruct((Bp, T), jnp.float32),
                   jax.ShapeDtypeStruct((Bp, H), jnp.float32),
                   jax.ShapeDtypeStruct((Bp, H), jnp.float32)),
        in_specs=[vmem, vmem, vmem],
        out_specs=(vmem, vmem, vmem),
        scratch_shapes=[pltpu.VMEM((T * Bp, H), jnp.float32)],
    )(x_tm, rnn_slab, fc_slab)

    # Strip batch padding; hidden_prev is (h_n, c_n), each (num_layers=1, B, H).
    return y_full[:B], (h_n[None, :B], c_n[None, :B])


# ---------------------------------------------------------------------------
# Deterministic parameter init (PyTorch-style uniform(-1/sqrt(fan), 1/sqrt(fan)))
# ---------------------------------------------------------------------------
def init_params(key, input_size, hidden_sizes):
    H, H1 = hidden_sizes
    keys = jax.random.split(key, 8)

    def uni(k, shape, bound):
        return jax.random.uniform(k, shape, jnp.float32, -bound, bound)

    k_rnn = 1.0 / float(H) ** 0.5
    k_fc1 = 1.0 / float(H) ** 0.5
    k_fc2 = 1.0 / float(H1) ** 0.5
    return dict(
        wih=uni(keys[0], (4 * H, input_size), k_rnn),     # weight_ih_l0
        whh=uni(keys[1], (4 * H, H), k_rnn),              # weight_hh_l0
        b_ih=uni(keys[2], (4 * H,), k_rnn),
        b_hh=uni(keys[3], (4 * H,), k_rnn),
        w1=uni(keys[4], (H1, H), k_fc1),                  # Linear(H, H1)
        b1=uni(keys[5], (H1,), k_fc1),
        w2=uni(keys[6], (1, H1), k_fc2),                  # Linear(H1, 1)
        b2=uni(keys[7], (1,), k_fc2),
    )


# ---------------------------------------------------------------------------
# Pure-JAX reference of the PyTorch forward (for correctness check)
# ---------------------------------------------------------------------------
def reference_forward(x, params):
    B, T, _ = x.shape
    H = params['whh'].shape[1]
    b = params['b_ih'] + params['b_hh']
    h = jnp.zeros((B, H), jnp.float32)
    c = jnp.zeros((B, H), jnp.float32)
    outs = []
    for t in range(T):
        gates = x[:, t, :] @ params['wih'].T + h @ params['whh'].T + b
        i_g, f_g, g_g, o_g = jnp.split(gates, 4, axis=-1)
        i_g = jax.nn.sigmoid(i_g)
        f_g = jax.nn.sigmoid(f_g)
        g_g = jnp.tanh(g_g)
        o_g = jax.nn.sigmoid(o_g)
        c = f_g * c + i_g * g_g
        h = o_g * jnp.tanh(c)
        outs.append(h)
    seq = jnp.stack(outs, axis=1)                         # (B, T, H)
    flat = seq.reshape(-1, H)
    z = jnp.maximum(flat @ params['w1'].T + params['b1'], 0.0)
    y = z @ params['w2'].T + params['b2']
    return y.reshape(B, -1), (h[None], c[None])


if __name__ == "__main__":
    B, T, INPUT_SIZE = 2, 8, 4
    HIDDEN_SIZES = [32, 16]

    key = jax.random.PRNGKey(0)
    k_x, k_p = jax.random.split(key)
    x = jax.random.normal(k_x, (B, T, INPUT_SIZE), jnp.float32)
    params = init_params(k_p, INPUT_SIZE, HIDDEN_SIZES)

    # Pack weights once (outside the per-call path), then run the jitted forward.
    rnn_slab, fc_slab = pack_params(params)
    y, (h_n, c_n) = jax.block_until_ready(
        rnn_base_model_forward(x, rnn_slab, fc_slab))

    y_ref, (h_ref, c_ref) = reference_forward(x, params)

    assert y.shape == (B, T) and h_n.shape == (1, B, HIDDEN_SIZES[0])
    assert jnp.allclose(y, y_ref, atol=2e-5, rtol=1e-5)
    assert jnp.allclose(h_n, h_ref, atol=2e-5, rtol=1e-5)
    assert jnp.allclose(c_n, c_ref, atol=2e-5, rtol=1e-5)
    print("KERNEL_OK")
</pallas_src>

<mosaic_0001>
module attributes {stable_mosaic.version = 11 : i64} {
  func.func @lstm_fc_kernel(%arg0: memref<64x4xf32, #tpu.memory_space<vmem>>, %arg1: memref<37x128xf32, #tpu.memory_space<vmem>>, %arg2: memref<35x16xf32, #tpu.memory_space<vmem>>, %arg3: memref<8x8xf32, #tpu.memory_space<vmem>>, %arg4: memref<8x32xf32, #tpu.memory_space<vmem>>, %arg5: memref<8x32xf32, #tpu.memory_space<vmem>>, %arg6: memref<64x32xf32, #tpu.memory_space<vmem>>) attributes {dimension_semantics = [], scalar_prefetch = 0 : i64, scratch_operands = 1 : i64, tpu.core_type = #tpu.core_type<tc>} {
    %c0 = arith.constant 0 : index
    %c0_0 = arith.constant 0 : index
    %0 = vector.load %arg1[%c0, %c0_0] : memref<37x128xf32, #tpu.memory_space<vmem>>, vector<4x128xf32>
    %c4 = arith.constant 4 : index
    %c0_1 = arith.constant 0 : index
    %1 = vector.load %arg1[%c4, %c0_1] : memref<37x128xf32, #tpu.memory_space<vmem>>, vector<1x128xf32>
    %c5 = arith.constant 5 : index
    %c0_2 = arith.constant 0 : index
    %2 = vector.load %arg1[%c5, %c0_2] : memref<37x128xf32, #tpu.memory_space<vmem>>, vector<32x128xf32>
    %c0_3 = arith.constant 0 : index
    %c0_4 = arith.constant 0 : index
    %3 = vector.load %arg0[%c0_3, %c0_4] : memref<64x4xf32, #tpu.memory_space<vmem>>, vector<64x4xf32>
    %cst = arith.constant dense<0.000000e+00> : vector<64x128xf32>
    %4 = tpu.matmul %3, %0, %cst {dimension_numbers = #tpu.dot_dimension_numbers<[1], [0], [0], [1], [0, 0, 1, 1], [], []>} : vector<64x4xf32>, vector<4x128xf32>, vector<64x128xf32> -> vector<64x128xf32>
    %5 = vector.broadcast %1 : vector<1x128xf32> to vector<64x128xf32>
    %6 = arith.addf %4, %5 : vector<64x128xf32>
    %7 = tpu.iota {dimensions = array<i32: 1>} : vector<8x128xi32>
    %c64_i32 = arith.constant 64 : i32
    %8 = vector.broadcast %c64_i32 : i32 to vector<8x128xi32>
    %9 = arith.cmpi sge, %7, %8 : vector<8x128xi32>
    %c96_i32 = arith.constant 96 : i32
    %10 = vector.broadcast %c96_i32 : i32 to vector<8x128xi32>
    %11 = arith.cmpi slt, %7, %10 : vector<8x128xi32>
    %12 = arith.andi %9, %11 : vector<8x128xi1>
    %cst_5 = arith.constant 0.000000e+00 : f32
    %13 = vector.broadcast %cst_5 : f32 to vector<8x32xf32>
    %cst_6 = arith.constant 0.000000e+00 : f32
    %14 = vector.broadcast %cst_6 : f32 to vector<8x32xf32>
    %15 = vector.extract_strided_slice %6 {offsets = [0, 0], sizes = [8, 128], strides = [1, 1]} : vector<64x128xf32> to vector<8x128xf32>
    %cst_7 = arith.constant dense<0.000000e+00> : vector<8x128xf32>
    %16 = tpu.matmul %13, %2, %cst_7 {dimension_numbers = #tpu.dot_dimension_numbers<[1], [0], [0], [1], [0, 0, 1, 1], [], []>} : vector<8x32xf32>, vector<32x128xf32>, vector<8x128xf32> -> vector<8x128xf32>
    %17 = arith.addf %15, %16 : vector<8x128xf32>
    %cst_8 = arith.constant 5.000000e-01 : f32
    %18 = vector.broadcast %cst_8 : f32 to vector<8x128xf32>
    %19 = arith.mulf %18, %17 : vector<8x128xf32>
    %20 = arith.select %12, %17, %19 : vector<8x128xi1>, vector<8x128xf32>
    %21 = math.tanh %20 : vector<8x128xf32>
    %cst_9 = arith.constant 1.000000e+00 : f32
    %22 = vector.broadcast %cst_9 : f32 to vector<8x128xf32>
    %23 = arith.addf %21, %22 : vector<8x128xf32>
    %cst_10 = arith.constant 5.000000e-01 : f32
    %24 = vector.broadcast %cst_10 : f32 to vector<8x128xf32>
    %25 = arith.mulf %24, %23 : vector<8x128xf32>
    %26 = arith.select %12, %21, %25 : vector<8x128xi1>, vector<8x128xf32>
    %27 = vector.extract_strided_slice %26 {offsets = [0, 0], sizes = [8, 32], strides = [1, 1]} : vector<8x128xf32> to vector<8x32xf32>
    %28 = vector.extract_strided_slice %26 {offsets = [0, 32], sizes = [8, 32], strides = [1, 1]} : vector<8x128xf32> to vector<8x32xf32>
    %29 = vector.extract_strided_slice %26 {offsets = [0, 64], sizes = [8, 32], strides = [1, 1]} : vector<8x128xf32> to vector<8x32xf32>
    %30 = vector.extract_strided_slice %26 {offsets = [0, 96], sizes = [8, 32], strides = [1, 1]} : vector<8x128xf32> to vector<8x32xf32>
    %31 = arith.mulf %28, %14 : vector<8x32xf32>
    %32 = arith.mulf %27, %29 : vector<8x32xf32>
    %33 = arith.addf %31, %32 : vector<8x32xf32>
    %34 = math.tanh %33 : vector<8x32xf32>
    %35 = arith.mulf %30, %34 : vector<8x32xf32>
    %c0_11 = arith.constant 0 : index
    %c0_12 = arith.constant 0 : index
    %36 = vector.load %arg6[%c0_11, %c0_12] : memref<64x32xf32, #tpu.memory_space<vmem>>, vector<8x32xf32>
    tpu.vector_store %arg6[%c0_11, %c0_12], %35 {strides = array<i32>} : memref<64x32xf32, #tpu.memory_space<vmem>>, vector<8x32xf32>,
    %37 = vector.extract_strided_slice %6 {offsets = [8, 0], sizes = [8, 128], strides = [1, 1]} : vector<64x128xf32> to vector<8x128xf32>
    %cst_13 = arith.constant dense<0.000000e+00> : vector<8x128xf32>
    %38 = tpu.matmul %35, %2, %cst_13 {dimension_numbers = #tpu.dot_dimension_numbers<[1], [0], [0], [1], [0, 0, 1, 1], [], []>} : vector<8x32xf32>, vector<32x128xf32>, vector<8x128xf32> -> vector<8x128xf32>
    %39 = arith.addf %37, %38 : vector<8x128xf32>
    %cst_14 = arith.constant 5.000000e-01 : f32
    %40 = vector.broadcast %cst_14 : f32 to vector<8x128xf32>
    %41 = arith.mulf %40, %39 : vector<8x128xf32>
    %42 = arith.select %12, %39, %41 : vector<8x128xi1>, vector<8x128xf32>
    %43 = math.tanh %42 : vector<8x128xf32>
    %cst_15 = arith.constant 1.000000e+00 : f32
    %44 = vector.broadcast %cst_15 : f32 to vector<8x128xf32>
    %45 = arith.addf %43, %44 : vector<8x128xf32>
    %cst_16 = arith.constant 5.000000e-01 : f32
    %46 = vector.broadcast %cst_16 : f32 to vector<8x128xf32>
    %47 = arith.mulf %46, %45 : vector<8x128xf32>
    %48 = arith.select %12, %43, %47 : vector<8x128xi1>, vector<8x128xf32>
    %49 = vector.extract_strided_slice %48 {offsets = [0, 0], sizes = [8, 32], strides = [1, 1]} : vector<8x128xf32> to vector<8x32xf32>
    %50 = vector.extract_strided_slice %48 {offsets = [0, 32], sizes = [8, 32], strides = [1, 1]} : vector<8x128xf32> to vector<8x32xf32>
    %51 = vector.extract_strided_slice %48 {offsets = [0, 64], sizes = [8, 32], strides = [1, 1]} : vector<8x128xf32> to vector<8x32xf32>
    %52 = vector.extract_strided_slice %48 {offsets = [0, 96], sizes = [8, 32], strides = [1, 1]} : vector<8x128xf32> to vector<8x32xf32>
    %53 = arith.mulf %50, %33 : vector<8x32xf32>
    %54 = arith.mulf %49, %51 : vector<8x32xf32>
    %55 = arith.addf %53, %54 : vector<8x32xf32>
    %56 = math.tanh %55 : vector<8x32xf32>
    %57 = arith.mulf %52, %56 : vector<8x32xf32>
    %c8 = arith.constant 8 : index
    %c0_17 = arith.constant 0 : index
    %58 = vector.load %arg6[%c8, %c0_17] : memref<64x32xf32, #tpu.memory_space<vmem>>, vector<8x32xf32>
    tpu.vector_store %arg6[%c8, %c0_17], %57 {strides = array<i32>} : memref<64x32xf32, #tpu.memory_space<vmem>>, vector<8x32xf32>,
    %59 = vector.extract_strided_slice %6 {offsets = [16, 0], sizes = [8, 128], strides = [1, 1]} : vector<64x128xf32> to vector<8x128xf32>
    %cst_18 = arith.constant dense<0.000000e+00> : vector<8x128xf32>
    %60 = tpu.matmul %57, %2, %cst_18 {dimension_numbers = #tpu.dot_dimension_numbers<[1], [0], [0], [1], [0, 0, 1, 1], [], []>} : vector<8x32xf32>, vector<32x128xf32>, vector<8x128xf32> -> vector<8x128xf32>
    %61 = arith.addf %59, %60 : vector<8x128xf32>
    %cst_19 = arith.constant 5.000000e-01 : f32
    %62 = vector.broadcast %cst_19 : f32 to vector<8x128xf32>
    %63 = arith.mulf %62, %61 : vector<8x128xf32>
    %64 = arith.select %12, %61, %63 : vector<8x128xi1>, vector<8x128xf32>
    %65 = math.tanh %64 : vector<8x128xf32>
    %cst_20 = arith.constant 1.000000e+00 : f32
    %66 = vector.broadcast %cst_20 : f32 to vector<8x128xf32>
    %67 = arith.addf %65, %66 : vector<8x128xf32>
    %cst_21 = arith.constant 5.000000e-01 : f32
    %68 = vector.broadcast %cst_21 : f32 to vector<8x128xf32>
    %69 = arith.mulf %68, %67 : vector<8x128xf32>
    %70 = arith.select %12, %65, %69 : vector<8x128xi1>, vector<8x128xf32>
    %71 = vector.extract_strided_slice %70 {offsets = [0, 0], sizes = [8, 32], strides = [1, 1]} : vector<8x128xf32> to vector<8x32xf32>
    %72 = vector.extract_strided_slice %70 {offsets = [0, 32], sizes = [8, 32], strides = [1, 1]} : vector<8x128xf32> to vector<8x32xf32>
    %73 = vector.extract_strided_slice %70 {offsets = [0, 64], sizes = [8, 32], strides = [1, 1]} : vector<8x128xf32> to vector<8x32xf32>
    %74 = vector.extract_strided_slice %70 {offsets = [0, 96], sizes = [8, 32], strides = [1, 1]} : vector<8x128xf32> to vector<8x32xf32>
    %75 = arith.mulf %72, %55 : vector<8x32xf32>
    %76 = arith.mulf %71, %73 : vector<8x32xf32>
    %77 = arith.addf %75, %76 : vector<8x32xf32>
    %78 = math.tanh %77 : vector<8x32xf32>
    %79 = arith.mulf %74, %78 : vector<8x32xf32>
    %c16 = arith.constant 16 : index
    %c0_22 = arith.constant 0 : index
    %80 = vector.load %arg6[%c16, %c0_22] : memref<64x32xf32, #tpu.memory_space<vmem>>, vector<8x32xf32>
    tpu.vector_store %arg6[%c16, %c0_22], %79 {strides = array<i32>} : memref<64x32xf32, #tpu.memory_space<vmem>>, vector<8x32xf32>,
    %81 = vector.extract_strided_slice %6 {offsets = [24, 0], sizes = [8, 128], strides = [1, 1]} : vector<64x128xf32> to vector<8x128xf32>
    %cst_23 = arith.constant dense<0.000000e+00> : vector<8x128xf32>
    %82 = tpu.matmul %79, %2, %cst_23 {dimension_numbers = #tpu.dot_dimension_numbers<[1], [0], [0], [1], [0, 0, 1, 1], [], []>} : vector<8x32xf32>, vector<32x128xf32>, vector<8x128xf32> -> vector<8x128xf32>
    %83 = arith.addf %81, %82 : vector<8x128xf32>
    %cst_24 = arith.constant 5.000000e-01 : f32
    %84 = vector.broadcast %cst_24 : f32 to vector<8x128xf32>
    %85 = arith.mulf %84, %83 : vector<8x128xf32>
    %86 = arith.select %12, %83, %85 : vector<8x128xi1>, vector<8x128xf32>
    %87 = math.tanh %86 : vector<8x128xf32>
    %cst_25 = arith.constant 1.000000e+00 : f32
    %88 = vector.broadcast %cst_25 : f32 to vector<8x128xf32>
    %89 = arith.addf %87, %88 : vector<8x128xf32>
    %cst_26 = arith.constant 5.000000e-01 : f32
    %90 = vector.broadcast %cst_26 : f32 to vector<8x128xf32>
    %91 = arith.mulf %90, %89 : vector<8x128xf32>
    %92 = arith.select %12, %87, %91 : vector<8x128xi1>, vector<8x128xf32>
    %93 = vector.extract_strided_slice %92 {offsets = [0, 0], sizes = [8, 32], strides = [1, 1]} : vector<8x128xf32> to vector<8x32xf32>
    %94 = vector.extract_strided_slice %92 {offsets = [0, 32], sizes = [8, 32], strides = [1, 1]} : vector<8x128xf32> to vector<8x32xf32>
    %95 = vector.extract_strided_slice %92 {offsets = [0, 64], sizes = [8, 32], strides = [1, 1]} : vector<8x128xf32> to vector<8x32xf32>
    %96 = vector.extract_strided_slice %92 {offsets = [0, 96], sizes = [8, 32], strides = [1, 1]} : vector<8x128xf32> to vector<8x32xf32>
    %97 = arith.mulf %94, %77 : vector<8x32xf32>
    %98 = arith.mulf %93, %95 : vector<8x32xf32>
    %99 = arith.addf %97, %98 : vector<8x32xf32>
    %100 = math.tanh %99 : vector<8x32xf32>
    %101 = arith.mulf %96, %100 : vector<8x32xf32>
    %c24 = arith.constant 24 : index
    %c0_27 = arith.constant 0 : index
    %102 = vector.load %arg6[%c24, %c0_27] : memref<64x32xf32, #tpu.memory_space<vmem>>, vector<8x32xf32>
    tpu.vector_store %arg6[%c24, %c0_27], %101 {strides = array<i32>} : memref<64x32xf32, #tpu.memory_space<vmem>>, vector<8x32xf32>,
    %103 = vector.extract_strided_slice %6 {offsets = [32, 0], sizes = [8, 128], strides = [1, 1]} : vector<64x128xf32> to vector<8x128xf32>
    %cst_28 = arith.constant dense<0.000000e+00> : vector<8x128xf32>
    %104 = tpu.matmul %101, %2, %cst_28 {dimension_numbers = #tpu.dot_dimension_numbers<[1], [0], [0], [1], [0, 0, 1, 1], [], []>} : vector<8x32xf32>, vector<32x128xf32>, vector<8x128xf32> -> vector<8x128xf32>
    %105 = arith.addf %103, %104 : vector<8x128xf32>
    %cst_29 = arith.constant 5.000000e-01 : f32
    %106 = vector.broadcast %cst_29 : f32 to vector<8x128xf32>
    %107 = arith.mulf %106, %105 : vector<8x128xf32>
    %108 = arith.select %12, %105, %107 : vector<8x128xi1>, vector<8x128xf32>
    %109 = math.tanh %108 : vector<8x128xf32>
    %cst_30 = arith.constant 1.000000e+00 : f32
    %110 = vector.broadcast %cst_30 : f32 to vector<8x128xf32>
    %111 = arith.addf %109, %110 : vector<8x128xf32>
    %cst_31 = arith.constant 5.000000e-01 : f32
    %112 = vector.broadcast %cst_31 : f32 to vector<8x128xf32>
    %113 = arith.mulf %112, %111 : vector<8x128xf32>
    %114 = arith.select %12, %109, %113 : vector<8x128xi1>, vector<8x128xf32>
    %115 = vector.extract_strided_slice %114 {offsets = [0, 0], sizes = [8, 32], strides = [1, 1]} : vector<8x128xf32> to vector<8x32xf32>
    %116 = vector.extract_strided_slice %114 {offsets = [0, 32], sizes = [8, 32], strides = [1, 1]} : vector<8x128xf32> to vector<8x32xf32>
    %117 = vector.extract_strided_slice %114 {offsets = [0, 64], sizes = [8, 32], strides = [1, 1]} : vector<8x128xf32> to vector<8x32xf32>
    %118 = vector.extract_strided_slice %114 {offsets = [0, 96], sizes = [8, 32], strides = [1, 1]} : vector<8x128xf32> to vector<8x32xf32>
    %119 = arith.mulf %116, %99 : vector<8x32xf32>
    %120 = arith.mulf %115, %117 : vector<8x32xf32>
    %121 = arith.addf %119, %120 : vector<8x32xf32>
    %122 = math.tanh %121 : vector<8x32xf32>
    %123 = arith.mulf %118, %122 : vector<8x32xf32>
    %c32 = arith.constant 32 : index
    %c0_32 = arith.constant 0 : index
    %124 = vector.load %arg6[%c32, %c0_32] : memref<64x32xf32, #tpu.memory_space<vmem>>, vector<8x32xf32>
    tpu.vector_store %arg6[%c32, %c0_32], %123 {strides = array<i32>} : memref<64x32xf32, #tpu.memory_space<vmem>>, vector<8x32xf32>,
    %125 = vector.extract_strided_slice %6 {offsets = [40, 0], sizes = [8, 128], strides = [1, 1]} : vector<64x128xf32> to vector<8x128xf32>
    %cst_33 = arith.constant dense<0.000000e+00> : vector<8x128xf32>
    %126 = tpu.matmul %123, %2, %cst_33 {dimension_numbers = #tpu.dot_dimension_numbers<[1], [0], [0], [1], [0, 0, 1, 1], [], []>} : vector<8x32xf32>, vector<32x128xf32>, vector<8x128xf32> -> vector<8x128xf32>
    %127 = arith.addf %125, %126 : vector<8x128xf32>
    %cst_34 = arith.constant 5.000000e-01 : f32
    %128 = vector.broadcast %cst_34 : f32 to vector<8x128xf32>
    %129 = arith.mulf %128, %127 : vector<8x128xf32>
    %130 = arith.select %12, %127, %129 : vector<8x128xi1>, vector<8x128xf32>
    %131 = math.tanh %130 : vector<8x128xf32>
    %cst_35 = arith.constant 1.000000e+00 : f32
    %132 = vector.broadcast %cst_35 : f32 to vector<8x128xf32>
    %133 = arith.addf %131, %132 : vector<8x128xf32>
    %cst_36 = arith.constant 5.000000e-01 : f32
    %134 = vector.broadcast %cst_36 : f32 to vector<8x128xf32>
    %135 = arith.mulf %134, %133 : vector<8x128xf32>
    %136 = arith.select %12, %131, %135 : vector<8x128xi1>, vector<8x128xf32>
    %137 = vector.extract_strided_slice %136 {offsets = [0, 0], sizes = [8, 32], strides = [1, 1]} : vector<8x128xf32> to vector<8x32xf32>
    %138 = vector.extract_strided_slice %136 {offsets = [0, 32], sizes = [8, 32], strides = [1, 1]} : vector<8x128xf32> to vector<8x32xf32>
    %139 = vector.extract_strided_slice %136 {offsets = [0, 64], sizes = [8, 32], strides = [1, 1]} : vector<8x128xf32> to vector<8x32xf32>
    %140 = vector.extract_strided_slice %136 {offsets = [0, 96], sizes = [8, 32], strides = [1, 1]} : vector<8x128xf32> to vector<8x32xf32>
    %141 = arith.mulf %138, %121 : vector<8x32xf32>
    %142 = arith.mulf %137, %139 : vector<8x32xf32>
    %143 = arith.addf %141, %142 : vector<8x32xf32>
    %144 = math.tanh %143 : vector<8x32xf32>
    %145 = arith.mulf %140, %144 : vector<8x32xf32>
    %c40 = arith.constant 40 : index
    %c0_37 = arith.constant 0 : index
    %146 = vector.load %arg6[%c40, %c0_37] : memref<64x32xf32, #tpu.memory_space<vmem>>, vector<8x32xf32>
    tpu.vector_store %arg6[%c40, %c0_37], %145 {strides = array<i32>} : memref<64x32xf32, #tpu.memory_space<vmem>>, vector<8x32xf32>,
    %147 = vector.extract_strided_slice %6 {offsets = [48, 0], sizes = [8, 128], strides = [1, 1]} : vector<64x128xf32> to vector<8x128xf32>
    %cst_38 = arith.constant dense<0.000000e+00> : vector<8x128xf32>
    %148 = tpu.matmul %145, %2, %cst_38 {dimension_numbers = #tpu.dot_dimension_numbers<[1], [0], [0], [1], [0, 0, 1, 1], [], []>} : vector<8x32xf32>, vector<32x128xf32>, vector<8x128xf32> -> vector<8x128xf32>
    %149 = arith.addf %147, %148 : vector<8x128xf32>
    %cst_39 = arith.constant 5.000000e-01 : f32
    %150 = vector.broadcast %cst_39 : f32 to vector<8x128xf32>
    %151 = arith.mulf %150, %149 : vector<8x128xf32>
    %152 = arith.select %12, %149, %151 : vector<8x128xi1>, vector<8x128xf32>
    %153 = math.tanh %152 : vector<8x128xf32>
    %cst_40 = arith.constant 1.000000e+00 : f32
    %154 = vector.broadcast %cst_40 : f32 to vector<8x128xf32>
    %155 = arith.addf %153, %154 : vector<8x128xf32>
    %cst_41 = arith.constant 5.000000e-01 : f32
    %156 = vector.broadcast %cst_41 : f32 to vector<8x128xf32>
    %157 = arith.mulf %156, %155 : vector<8x128xf32>
    %158 = arith.select %12, %153, %157 : vector<8x128xi1>, vector<8x128xf32>
    %159 = vector.extract_strided_slice %158 {offsets = [0, 0], sizes = [8, 32], strides = [1, 1]} : vector<8x128xf32> to vector<8x32xf32>
    %160 = vector.extract_strided_slice %158 {offsets = [0, 32], sizes = [8, 32], strides = [1, 1]} : vector<8x128xf32> to vector<8x32xf32>
    %161 = vector.extract_strided_slice %158 {offsets = [0, 64], sizes = [8, 32], strides = [1, 1]} : vector<8x128xf32> to vector<8x32xf32>
    %162 = vector.extract_strided_slice %158 {offsets = [0, 96], sizes = [8, 32], strides = [1, 1]} : vector<8x128xf32> to vector<8x32xf32>
    %163 = arith.mulf %160, %143 : vector<8x32xf32>
    %164 = arith.mulf %159, %161 : vector<8x32xf32>
    %165 = arith.addf %163, %164 : vector<8x32xf32>
    %166 = math.tanh %165 : vector<8x32xf32>
    %167 = arith.mulf %162, %166 : vector<8x32xf32>
    %c48 = arith.constant 48 : index
    %c0_42 = arith.constant 0 : index
    %168 = vector.load %arg6[%c48, %c0_42] : memref<64x32xf32, #tpu.memory_space<vmem>>, vector<8x32xf32>
    tpu.vector_store %arg6[%c48, %c0_42], %167 {strides = array<i32>} : memref<64x32xf32, #tpu.memory_space<vmem>>, vector<8x32xf32>,
    %169 = vector.extract_strided_slice %6 {offsets = [56, 0], sizes = [8, 128], strides = [1, 1]} : vector<64x128xf32> to vector<8x128xf32>
    %cst_43 = arith.constant dense<0.000000e+00> : vector<8x128xf32>
    %170 = tpu.matmul %167, %2, %cst_43 {dimension_numbers = #tpu.dot_dimension_numbers<[1], [0], [0], [1], [0, 0, 1, 1], [], []>} : vector<8x32xf32>, vector<32x128xf32>, vector<8x128xf32> -> vector<8x128xf32>
    %171 = arith.addf %169, %170 : vector<8x128xf32>
    %cst_44 = arith.constant 5.000000e-01 : f32
    %172 = vector.broadcast %cst_44 : f32 to vector<8x128xf32>
    %173 = arith.mulf %172, %171 : vector<8x128xf32>
    %174 = arith.select %12, %171, %173 : vector<8x128xi1>, vector<8x128xf32>
    %175 = math.tanh %174 : vector<8x128xf32>
    %cst_45 = arith.constant 1.000000e+00 : f32
    %176 = vector.broadcast %cst_45 : f32 to vector<8x128xf32>
    %177 = arith.addf %175, %176 : vector<8x128xf32>
    %cst_46 = arith.constant 5.000000e-01 : f32
    %178 = vector.broadcast %cst_46 : f32 to vector<8x128xf32>
    %179 = arith.mulf %178, %177 : vector<8x128xf32>
    %180 = arith.select %12, %175, %179 : vector<8x128xi1>, vector<8x128xf32>
    %181 = vector.extract_strided_slice %180 {offsets = [0, 0], sizes = [8, 32], strides = [1, 1]} : vector<8x128xf32> to vector<8x32xf32>
    %182 = vector.extract_strided_slice %180 {offsets = [0, 32], sizes = [8, 32], strides = [1, 1]} : vector<8x128xf32> to vector<8x32xf32>
    %183 = vector.extract_strided_slice %180 {offsets = [0, 64], sizes = [8, 32], strides = [1, 1]} : vector<8x128xf32> to vector<8x32xf32>
    %184 = vector.extract_strided_slice %180 {offsets = [0, 96], sizes = [8, 32], strides = [1, 1]} : vector<8x128xf32> to vector<8x32xf32>
    %185 = arith.mulf %182, %165 : vector<8x32xf32>
    %186 = arith.mulf %181, %183 : vector<8x32xf32>
    %187 = arith.addf %185, %186 : vector<8x32xf32>
    %188 = math.tanh %187 : vector<8x32xf32>
    %189 = arith.mulf %184, %188 : vector<8x32xf32>
    %c56 = arith.constant 56 : index
    %c0_47 = arith.constant 0 : index
    %190 = vector.load %arg6[%c56, %c0_47] : memref<64x32xf32, #tpu.memory_space<vmem>>, vector<8x32xf32>
    tpu.vector_store %arg6[%c56, %c0_47], %189 {strides = array<i32>} : memref<64x32xf32, #tpu.memory_space<vmem>>, vector<8x32xf32>,
    %c0_48 = arith.constant 0 : index
    %c0_49 = arith.constant 0 : index
    %191 = vector.load %arg4[%c0_48, %c0_49] : memref<8x32xf32, #tpu.memory_space<vmem>>, vector<8x32xf32>
    tpu.vector_store %arg4[%c0_48, %c0_49], %189 {strides = array<i32>} : memref<8x32xf32, #tpu.memory_space<vmem>>, vector<8x32xf32>,
    %c0_50 = arith.constant 0 : index
    %c0_51 = arith.constant 0 : index
    %192 = vector.load %arg5[%c0_50, %c0_51] : memref<8x32xf32, #tpu.memory_space<vmem>>, vector<8x32xf32>
    tpu.vector_store %arg5[%c0_50, %c0_51], %187 {strides = array<i32>} : memref<8x32xf32, #tpu.memory_space<vmem>>, vector<8x32xf32>,
    %c0_52 = arith.constant 0 : index
    %c0_53 = arith.constant 0 : index
    %193 = vector.load %arg2[%c0_52, %c0_53] : memref<35x16xf32, #tpu.memory_space<vmem>>, vector<32x16xf32>
    %c32_54 = arith.constant 32 : index
    %c0_55 = arith.constant 0 : index
    %194 = vector.load %arg2[%c32_54, %c0_55] : memref<35x16xf32, #tpu.memory_space<vmem>>, vector<1x16xf32>
    %c33 = arith.constant 33 : index
    %c0_56 = arith.constant 0 : index
    %195 = vector.load %arg2[%c33, %c0_56] : memref<35x16xf32, #tpu.memory_space<vmem>>, vector<1x16xf32>
    %c34 = arith.constant 34 : index
    %c0_57 = arith.constant 0 : index
    %196 = vector.load %arg2[%c34, %c0_57] : memref<35x16xf32, #tpu.memory_space<vmem>>, vector<1x1xf32>
    %c0_58 = arith.constant 0 : index
    %c0_59 = arith.constant 0 : index
    %197 = vector.load %arg6[%c0_58, %c0_59] : memref<64x32xf32, #tpu.memory_space<vmem>>, vector<64x32xf32>
    %cst_60 = arith.constant dense<0.000000e+00> : vector<64x16xf32>
    %198 = tpu.matmul %197, %193, %cst_60 {dimension_numbers = #tpu.dot_dimension_numbers<[1], [0], [0], [1], [0, 0, 1, 1], [], []>} : vector<64x32xf32>, vector<32x16xf32>, vector<64x16xf32> -> vector<64x16xf32>
    %199 = vector.broadcast %194 : vector<1x16xf32> to vector<64x16xf32>
    %200 = arith.addf %198, %199 : vector<64x16xf32>
    %cst_61 = arith.constant 0.000000e+00 : f32
    %201 = vector.broadcast %cst_61 : f32 to vector<64x16xf32>
    %202 = arith.maximumf %200, %201 : vector<64x16xf32>
    %203 = vector.broadcast %195 : vector<1x16xf32> to vector<64x16xf32>
    %204 = arith.mulf %202, %203 : vector<64x16xf32>
    %cst_62 = arith.constant dense<0.000000e+00> : vector<64xf32>
    %205 = vector.multi_reduction <add>, %204, %cst_62 [1] : vector<64x16xf32> to vector<64xf32>
    %206 = vector.shape_cast %205 : vector<64xf32> to vector<64x1xf32>
    %207 = vector.broadcast %196 : vector<1x1xf32> to vector<64x1xf32>
    %208 = arith.addf %206, %207 : vector<64x1xf32>
    %209 = tpu.iota {dimensions = array<i32: 1>} : vector<8x8xi32>
    %cst_63 = arith.constant 0.000000e+00 : f32
    %210 = vector.broadcast %cst_63 : f32 to vector<8x8xf32>
    %c0_i32 = arith.constant 0 : i32
    %211 = vector.broadcast %c0_i32 : i32 to vector<8x8xi32>
    %212 = arith.cmpi eq, %209, %211 : vector<8x8xi32>
    %213 = vector.extract_strided_slice %208 {offsets = [0, 0], sizes = [8, 1], strides = [1, 1]} : vector<64x1xf32> to vector<8x1xf32>
    %214 = vector.shape_cast %213 : vector<8x1xf32> to vector<8x1xf32>
    %215 = vector.broadcast %214 : vector<8x1xf32> to vector<8x8xf32>
    %216 = arith.select %212, %215, %210 : vector<8x8xi1>, vector<8x8xf32>
    %c1_i32 = arith.constant 1 : i32
    %217 = vector.broadcast %c1_i32 : i32 to vector<8x8xi32>
    %218 = arith.cmpi eq, %209, %217 : vector<8x8xi32>
    %219 = vector.extract_strided_slice %208 {offsets = [8, 0], sizes = [8, 1], strides = [1, 1]} : vector<64x1xf32> to vector<8x1xf32>
    %220 = vector.shape_cast %219 : vector<8x1xf32> to vector<8x1xf32>
    %221 = vector.broadcast %220 : vector<8x1xf32> to vector<8x8xf32>
    %222 = arith.select %218, %221, %216 : vector<8x8xi1>, vector<8x8xf32>
    %c2_i32 = arith.constant 2 : i32
    %223 = vector.broadcast %c2_i32 : i32 to vector<8x8xi32>
    %224 = arith.cmpi eq, %209, %223 : vector<8x8xi32>
    %225 = vector.extract_strided_slice %208 {offsets = [16, 0], sizes = [8, 1], strides = [1, 1]} : vector<64x1xf32> to vector<8x1xf32>
    %226 = vector.shape_cast %225 : vector<8x1xf32> to vector<8x1xf32>
    %227 = vector.broadcast %226 : vector<8x1xf32> to vector<8x8xf32>
    %228 = arith.select %224, %227, %222 : vector<8x8xi1>, vector<8x8xf32>
    %c3_i32 = arith.constant 3 : i32
    %229 = vector.broadcast %c3_i32 : i32 to vector<8x8xi32>
    %230 = arith.cmpi eq, %209, %229 : vector<8x8xi32>
    %231 = vector.extract_strided_slice %208 {offsets = [24, 0], sizes = [8, 1], strides = [1, 1]} : vector<64x1xf32> to vector<8x1xf32>
    %232 = vector.shape_cast %231 : vector<8x1xf32> to vector<8x1xf32>
    %233 = vector.broadcast %232 : vector<8x1xf32> to vector<8x8xf32>
    %234 = arith.select %230, %233, %228 : vector<8x8xi1>, vector<8x8xf32>
    %c4_i32 = arith.constant 4 : i32
    %235 = vector.broadcast %c4_i32 : i32 to vector<8x8xi32>
    %236 = arith.cmpi eq, %209, %235 : vector<8x8xi32>
    %237 = vector.extract_strided_slice %208 {offsets = [32, 0], sizes = [8, 1], strides = [1, 1]} : vector<64x1xf32> to vector<8x1xf32>
    %238 = vector.shape_cast %237 : vector<8x1xf32> to vector<8x1xf32>
    %239 = vector.broadcast %238 : vector<8x1xf32> to vector<8x8xf32>
    %240 = arith.select %236, %239, %234 : vector<8x8xi1>, vector<8x8xf32>
    %c5_i32 = arith.constant 5 : i32
    %241 = vector.broadcast %c5_i32 : i32 to vector<8x8xi32>
    %242 = arith.cmpi eq, %209, %241 : vector<8x8xi32>
    %243 = vector.extract_strided_slice %208 {offsets = [40, 0], sizes = [8, 1], strides = [1, 1]} : vector<64x1xf32> to vector<8x1xf32>
    %244 = vector.shape_cast %243 : vector<8x1xf32> to vector<8x1xf32>
    %245 = vector.broadcast %244 : vector<8x1xf32> to vector<8x8xf32>
    %246 = arith.select %242, %245, %240 : vector<8x8xi1>, vector<8x8xf32>
    %c6_i32 = arith.constant 6 : i32
    %247 = vector.broadcast %c6_i32 : i32 to vector<8x8xi32>
    %248 = arith.cmpi eq, %209, %247 : vector<8x8xi32>
    %249 = vector.extract_strided_slice %208 {offsets = [48, 0], sizes = [8, 1], strides = [1, 1]} : vector<64x1xf32> to vector<8x1xf32>
    %250 = vector.shape_cast %249 : vector<8x1xf32> to vector<8x1xf32>
    %251 = vector.broadcast %250 : vector<8x1xf32> to vector<8x8xf32>
    %252 = arith.select %248, %251, %246 : vector<8x8xi1>, vector<8x8xf32>
    %c7_i32 = arith.constant 7 : i32
    %253 = vector.broadcast %c7_i32 : i32 to vector<8x8xi32>
    %254 = arith.cmpi eq, %209, %253 : vector<8x8xi32>
    %255 = vector.extract_strided_slice %208 {offsets = [56, 0], sizes = [8, 1], strides = [1, 1]} : vector<64x1xf32> to vector<8x1xf32>
    %256 = vector.shape_cast %255 : vector<8x1xf32> to vector<8x1xf32>
    %257 = vector.broadcast %256 : vector<8x1xf32> to vector<8x8xf32>
    %258 = arith.select %254, %257, %252 : vector<8x8xi1>, vector<8x8xf32>
    %c0_64 = arith.constant 0 : index
    %c0_65 = arith.constant 0 : index
    %259 = vector.load %arg3[%c0_64, %c0_65] : memref<8x8xf32, #tpu.memory_space<vmem>>, vector<8x8xf32>
    tpu.vector_store %arg3[%c0_64, %c0_65], %258 {strides = array<i32>} : memref<8x8xf32, #tpu.memory_space<vmem>>, vector<8x8xf32>,
    return
  }
}

</mosaic_0001>

<llo_original>
// kernel: rnn_base_model_forward.1
$region0: #{rnn_base_model_forward.1}
  #allocation0 [shape = 'u32[]', space=smem, size = 0x4, offset = 0x4, fixed_abs, tag = 'smem constant byte address 0x4 - core index']
  #allocation1 [shape = 'u32[144,128]{1,0:T(1,128)}', space=vmem, size = 0x12000, scoped, tag = 'internal scratch']
  #allocation2 [shape = 'f32[64,32]{1,0:T(8,128)}', space=vmem, size = 0x8000, scoped, tag = 'scratch operand']
  %s0 = inlined_call_operand.vmem [shape: f32[64,4], index: 0, kind: input, shape index: {}]
  %s1 = inlined_call_operand.vmem [shape: f32[37,128], index: 1, kind: input, shape index: {}]
  %s2 = inlined_call_operand.vmem [shape: f32[35,16], index: 2, kind: input, shape index: {}]
  %s3 = inlined_call_operand.vmem [shape: f32[8,8], index: 3, kind: output, shape index: {0}]
  %s4 = inlined_call_operand.vmem [shape: f32[8,32], index: 4, kind: output, shape index: {1}]
  %s5 = inlined_call_operand.vmem [shape: f32[8,32], index: 5, kind: output, shape index: {2}]
  %6 = xla_tuple %s3, %s4, %s5
  %s7 = sld [smem:[#allocation0]]
  $region38: #{rnn_base_model_forward.1} parent=0
    _
  %s9 = ssub.s32 1, %s7
  %s10 = scalar_select 0, %s9, %s7
  // Predicated region
  $region2: #{rnn_base_model_forward.1} parent=0 // pred_check
    _
  $region3: #{rnn_base_model_forward.1} parent=0 // pred_check_branch
    %12 = sbr.rel (0) target = $region5
  $region4: #{rnn_base_model_forward.1} parent=0 // pred_region
    _
  $region5: #{rnn_base_model_forward.1} parent=0 // pred_fallthru
    _
  // Predicated region
  $region6: #{rnn_base_model_forward.1} parent=0 // pred_check
    _
  $region7: #{rnn_base_model_forward.1} parent=0 // pred_check_branch
    %14 = sbr.rel (0) target = $region9
  $region8: #{rnn_base_model_forward.1} parent=0 // pred_region
    _
  $region9: #{rnn_base_model_forward.1} parent=0 // pred_fallthru
    _
  // Predicated region
  $region10: #{rnn_base_model_forward.1} parent=0 // pred_check
    _
  $region11: #{rnn_base_model_forward.1} parent=0 // pred_check_branch
    %16 = sbr.rel (0) target = $region13
  $region12: #{rnn_base_model_forward.1} parent=0 // pred_region
    _
  $region13: #{rnn_base_model_forward.1} parent=0 // pred_fallthru
    _
  %v17 = vld [vmem:[%s1] sm:$0xf]
  %v18 = vld [vmem:[%s1 + $0x4] sm:$0x1]
  %v19 = vld [vmem:[%s1 + $0x5] sm:$0xff]
  %v20 = vld [vmem:[%s1 + $0xd] sm:$0xff]
  %v21 = vld [vmem:[%s1 + $0x15] sm:$0xff]
  %v22 = vld [vmem:[%s1 + $0x1d] sm:$0xff]
  %v23 = vld [vmem:[%s0] sm:$0xff]
  %v24 = vld [vmem:[%s0 + $0x8] sm:$0xff]
  %v25 = vld [vmem:[%s0 + $0x10] sm:$0xff]
  %v26 = vld [vmem:[%s0 + $0x18] sm:$0xff]
  %v27 = vld [vmem:[%s0 + $0x20] sm:$0xff]
  %v28 = vld [vmem:[%s0 + $0x28] sm:$0xff]
  %v29 = vld [vmem:[%s0 + $0x30] sm:$0xff]
  %v30 = vld [vmem:[%s0 + $0x38] sm:$0xff]
  %v31 = vlaneseq
  %v32 = vshrl.u32 %v31, 7
  %v33 = vsub.s32 0, %v32
  %v34 = vrot.slane %v18, %v33
  %vm35 = vcmask 31744
  %v37 = vsel %vm35, %v23, 0
  %v40 = vsel %vm35, %v24, 0
  %v43 = vsel %vm35, %v25, 0
  %v46 = vsel %vm35, %v26, 0
  %v49 = vsel %vm35, %v27, 0
  %v52 = vsel %vm35, %v28, 0
  %v55 = vsel %vm35, %v29, 0
  %v58 = vsel %vm35, %v30, 0
  %vm60 = vcmask 1043456
  %v62 = vsel %vm60, %v17, 0
  %64 = vmatprep.subr.mxu0 0.0
  %65 = vmatpush1.msra.mxu0 0.0
  %66 = vmatprep.subr.mxu0 0.0
  %67 = vmatpush1.msra.mxu0 0.0
  %68 = vmatprep.subr.mxu0 0.0
  %69 = vmatpush1.msra.mxu0 0.0
  %70 = vmatprep.subr.mxu0 0.0
  %71 = vmatpush1.msra.mxu0 0.0
  %72 = vmatprep.subr.mxu0 0.0
  %73 = vmatpush1.msra.mxu0 0.0
  %74 = vmatprep.subr.mxu0 0.0
  %75 = vmatpush1.msra.mxu0 0.0
  %76 = vmatprep.subr.mxu0 0.0
  %77 = vmatpush1.msra.mxu0 0.0
  %78 = vmatprep.subr.mxu0 0.0
  %79 = vmatpush1.msra.mxu0 0.0
  %80 = vmatprep.subr.mxu0 0.0
  %81 = vmatpush1.msra.mxu0 0.0
  %82 = vmatprep.subr.mxu0 0.0
  %83 = vmatpush1.msra.mxu0 0.0
  %84 = vmatprep.subr.mxu0 0.0
  %85 = vmatpush1.msra.mxu0 0.0
  %86 = vmatprep.subr.mxu0 0.0
  %87 = vmatpush1.msra.mxu0 0.0
  %88 = vmatprep.subr.mxu0 0.0
  %89 = vmatpush1.msra.mxu0 0.0
  %90 = vmatprep.subr.mxu0 0.0
  %91 = vmatpush1.msra.mxu0 0.0
  %92 = vmatprep.subr.mxu0 0.0
  %93 = vmatpush1.msra.mxu0 0.0
  %94 = vmatprep.subr.mxu0 0.0
  %95 = vmatpush1.msra.mxu0 %v62
  %96 = vmatprep.subr.mxu0 0.0
  %97 = vmatpush2.msra.mxu0 0.0
  %98 = vmatprep.subr.mxu0 0.0
  %99 = vmatpush2.msra.mxu0 0.0
  %100 = vmatprep.subr.mxu0 0.0
  %101 = vmatpush2.msra.mxu0 0.0
  %102 = vmatprep.subr.mxu0 0.0
  %103 = vmatpush2.msra.mxu0 0.0
  %104 = vmatprep.subr.mxu0 0.0
  %105 = vmatpush2.msra.mxu0 0.0
  %106 = vmatprep.subr.mxu0 0.0
  %107 = vmatpush2.msra.mxu0 0.0
  %108 = vmatprep.subr.mxu0 0.0
  %109 = vmatpush2.msra.mxu0 0.0
  %110 = vmatprep.subr.mxu0 0.0
  %111 = vmatpush2.msra.mxu0 0.0
  %112 = vmatprep.subr.mxu0 0.0
  %113 = vmatpush2.msra.mxu0 0.0
  %114 = vmatprep.subr.mxu0 0.0
  %115 = vmatpush2.msra.mxu0 0.0
  %116 = vmatprep.subr.mxu0 0.0
  %117 = vmatpush2.msra.mxu0 0.0
  %118 = vmatprep.subr.mxu0 0.0
  %119 = vmatpush2.msra.mxu0 0.0
  %120 = vmatprep.subr.mxu0 0.0
  %121 = vmatpush2.msra.mxu0 0.0
  %122 = vmatprep.subr.mxu0 0.0
  %123 = vmatpush2.msra.mxu0 0.0
  %124 = vmatprep.subr.mxu0 0.0
  %125 = vmatpush2.msra.mxu0 0.0
  %126 = vmatprep.subr.mxu0 0.0
  %127 = vmatpush2.msra.mxu0 0.0
  %128 = vmatprep.mubr.f32.mxu0 0.0
  %129 = vmatmul.mubr.f32.gmra.mxu0 %v37
  %v130 = vpop.f32.mrf.mxu0
  %v131 = vadd.f32 %v34, %v130
  %v132 = vpop.f32.mrf.mxu0
  %133 = vmatprep.mubr.f32.mxu0 0.0
  %134 = vmatmul.mubr.f32.gmra.mxu0 %v40
  %v135 = vpop.f32.mrf.mxu0
  %v136 = vadd.f32 %v34, %v135
  %v137 = vpop.f32.mrf.mxu0
  %138 = vmatprep.mubr.f32.mxu0 0.0
  %139 = vmatmul.mubr.f32.gmra.mxu0 %v43
  %v140 = vpop.f32.mrf.mxu0
  %v141 = vadd.f32 %v34, %v140
  %v142 = vpop.f32.mrf.mxu0
  %143 = vmatprep.mubr.f32.mxu0 0.0
  %144 = vmatmul.mubr.f32.gmra.mxu0 %v46
  %v145 = vpop.f32.mrf.mxu0
  %v146 = vadd.f32 %v34, %v145
  %v147 = vpop.f32.mrf.mxu0
  %148 = vmatprep.mubr.f32.mxu0 0.0
  %149 = vmatmul.mubr.f32.gmra.mxu0 %v49
  %v150 = vpop.f32.mrf.mxu0
  %v151 = vadd.f32 %v34, %v150
  %v152 = vpop.f32.mrf.mxu0
  %153 = vmatprep.mubr.f32.mxu0 0.0
  %154 = vmatmul.mubr.f32.gmra.mxu0 %v52
  %v155 = vpop.f32.mrf.mxu0
  %v156 = vadd.f32 %v34, %v155
  %v157 = vpop.f32.mrf.mxu0
  %158 = vmatprep.mubr.f32.mxu0 0.0
  %159 = vmatmul.mubr.f32.gmra.mxu0 %v55
  %v160 = vpop.f32.mrf.mxu0
  %v161 = vadd.f32 %v34, %v160
  %v162 = vpop.f32.mrf.mxu0
  %163 = vmatprep.mubr.f32.mxu0 0.0
  %164 = vmatmul.mubr.f32.gmra.mxu0 %v58
  %v165 = vpop.f32.mrf.mxu0
  %v166 = vadd.f32 %v34, %v165
  %v167 = vpop.f32.mrf.mxu0
  %168 = vdwg.mxu0
  %v169 = vlaneseq
  %v170 = vand.u32 %v169, 127
  %vm171 = vcmp.ge.s32.totalorder %v170, 64
  %vm172 = vcmp.lt.s32.totalorder %v170, 96
  %vm173 = vmand %vm171, %vm172
  %vm174 = vcmask 261120
  %v176 = vsel %vm174, 0.0, 0
  %178 = vmatprep.subr.mxu0 0.0
  %179 = vmatpush1.msra.mxu0 0.0
  %180 = vmatprep.subr.mxu0 0.0
  %181 = vmatpush1.msra.mxu0 0.0
  %182 = vmatprep.subr.mxu0 0.0
  %183 = vmatpush1.msra.mxu0 0.0
  %184 = vmatprep.subr.mxu0 0.0
  %185 = vmatpush1.msra.mxu0 0.0
  %186 = vmatprep.subr.mxu0 0.0
  %187 = vmatpush1.msra.mxu0 0.0
  %188 = vmatprep.subr.mxu0 0.0
  %189 = vmatpush1.msra.mxu0 0.0
  %190 = vmatprep.subr.mxu0 0.0
  %191 = vmatpush1.msra.mxu0 0.0
  %192 = vmatprep.subr.mxu0 0.0
  %193 = vmatpush1.msra.mxu0 0.0
  %194 = vmatprep.subr.mxu0 0.0
  %195 = vmatpush1.msra.mxu0 0.0
  %196 = vmatprep.subr.mxu0 0.0
  %197 = vmatpush1.msra.mxu0 0.0
  %198 = vmatprep.subr.mxu0 0.0
  %199 = vmatpush1.msra.mxu0 0.0
  %200 = vmatprep.subr.mxu0 0.0
  %201 = vmatpush1.msra.mxu0 0.0
  %202 = vmatprep.subr.mxu0 0.0
  %203 = vmatpush1.msra.mxu0 %v22
  %204 = vmatprep.subr.mxu0 0.0
  %205 = vmatpush1.msra.mxu0 %v21
  %206 = vmatprep.subr.mxu0 0.0
  %207 = vmatpush1.msra.mxu0 %v20
  %208 = vmatprep.subr.mxu0 0.0
  %209 = vmatpush1.msra.mxu0 %v19
  %210 = vmatprep.subr.mxu0 0.0
  %211 = vmatpush2.msra.mxu0 0.0
  %212 = vmatprep.subr.mxu0 0.0
  %213 = vmatpush2.msra.mxu0 0.0
  %214 = vmatprep.subr.mxu0 0.0
  %215 = vmatpush2.msra.mxu0 0.0
  %216 = vmatprep.subr.mxu0 0.0
  %217 = vmatpush2.msra.mxu0 0.0
  %218 = vmatprep.subr.mxu0 0.0
  %219 = vmatpush2.msra.mxu0 0.0
  %220 = vmatprep.subr.mxu0 0.0
  %221 = vmatpush2.msra.mxu0 0.0
  %222 = vmatprep.subr.mxu0 0.0
  %223 = vmatpush2.msra.mxu0 0.0
  %224 = vmatprep.subr.mxu0 0.0
  %225 = vmatpush2.msra.mxu0 0.0
  %226 = vmatprep.subr.mxu0 0.0
  %227 = vmatpush2.msra.mxu0 0.0
  %228 = vmatprep.subr.mxu0 0.0
  %229 = vmatpush2.msra.mxu0 0.0
  %230 = vmatprep.subr.mxu0 0.0
  %231 = vmatpush2.msra.mxu0 0.0
  %232 = vmatprep.subr.mxu0 0.0
  %233 = vmatpush2.msra.mxu0 0.0
  %234 = vmatprep.subr.mxu0 0.0
  %235 = vmatpush2.msra.mxu0 0.0
  %236 = vmatprep.subr.mxu0 0.0
  %237 = vmatpush2.msra.mxu0 0.0
  %238 = vmatprep.subr.mxu0 0.0
  %239 = vmatpush2.msra.mxu0 0.0
  %240 = vmatprep.subr.mxu0 0.0
  %241 = vmatpush2.msra.mxu0 0.0
  %242 = vmatprep.mubr.f32.mxu0 0.0
  %243 = vmatmul.mubr.f32.gmra.mxu0 %v176
  %v244 = vpop.f32.mrf.mxu0
  %v245 = vadd.f32 0.0, %v244
  %v246 = vpop.f32.mrf.mxu0
  %247 = vdwg.mxu0
  %v248 = vadd.f32 %v131, %v245
  %v249 = vmul.f32 %v248, 0.5
  %v250 = vsel %vm173, %v248, %v249
  %v251 = vtanh.pop %v250
  %v252 = vadd.f32 %v251, 1.0
  %v253 = vmul.f32 %v252, 0.5
  %v254 = vsel %vm173, %v251, %v253
  %v255 = vmul.f32 %v254, 0.0
  %257 = vrot.lane.b32.xlu0 %v254, 64
  %v258 = vpop.permute.xlu0 %257
  %v260 = vmul.f32 %v254, %v258
  %262 = vrot.lane.b32.xlu0 %v260, 32
  %v263 = vpop.permute.xlu0 %262
  %v265 = vadd.f32 %v255, %v263
  %v266 = vtanh.pop %v265
  %268 = vrot.lane.b32.xlu0 %v266, 64
  %v269 = vpop.permute.xlu0 %268
  %v271 = vmul.f32 %v254, %v269
  %273 = vrot.lane.b32.xlu0 %v271, 32
  %v274 = vpop.permute.xlu0 %273
  %276 = vst.msk [vmem:[#allocation2] sm:$0xff] %vm174, %v274
  %v277 = vsel %vm174, %v274, 0
  %279 = vmatprep.subr.mxu0 0.0
  %280 = vmatpush1.msra.mxu0 0.0
  %281 = vmatprep.subr.mxu0 0.0
  %282 = vmatpush1.msra.mxu0 0.0
  %283 = vmatprep.subr.mxu0 0.0
  %284 = vmatpush1.msra.mxu0 0.0
  %285 = vmatprep.subr.mxu0 0.0
  %286 = vmatpush1.msra.mxu0 0.0
  %287 = vmatprep.subr.mxu0 0.0
  %288 = vmatpush1.msra.mxu0 0.0
  %289 = vmatprep.subr.mxu0 0.0
  %290 = vmatpush1.msra.mxu0 0.0
  %291 = vmatprep.subr.mxu0 0.0
  %292 = vmatpush1.msra.mxu0 0.0
  %293 = vmatprep.subr.mxu0 0.0
  %294 = vmatpush1.msra.mxu0 0.0
  %295 = vmatprep.subr.mxu0 0.0
  %296 = vmatpush1.msra.mxu0 0.0
  %297 = vmatprep.subr.mxu0 0.0
  %298 = vmatpush1.msra.mxu0 0.0
  %299 = vmatprep.subr.mxu0 0.0
  %300 = vmatpush1.msra.mxu0 0.0
  %301 = vmatprep.subr.mxu0 0.0
  %302 = vmatpush1.msra.mxu0 0.0
  %303 = vmatprep.subr.mxu0 0.0
  %304 = vmatpush1.msra.mxu0 %v22
  %305 = vmatprep.subr.mxu0 0.0
  %306 = vmatpush1.msra.mxu0 %v21
  %307 = vmatprep.subr.mxu0 0.0
  %308 = vmatpush1.msra.mxu0 %v20
  %309 = vmatprep.subr.mxu0 0.0
  %310 = vmatpush1.msra.mxu0 %v19
  %311 = vmatprep.subr.mxu0 0.0
  %312 = vmatpush2.msra.mxu0 0.0
  %313 = vmatprep.subr.mxu0 0.0
  %314 = vmatpush2.msra.mxu0 0.0
  %315 = vmatprep.subr.mxu0 0.0
  %316 = vmatpush2.msra.mxu0 0.0
  %317 = vmatprep.subr.mxu0 0.0
  %318 = vmatpush2.msra.mxu0 0.0
  %319 = vmatprep.subr.mxu0 0.0
  %320 = vmatpush2.msra.mxu0 0.0
  %321 = vmatprep.subr.mxu0 0.0
  %322 = vmatpush2.msra.mxu0 0.0
  %323 = vmatprep.subr.mxu0 0.0
  %324 = vmatpush2.msra.mxu0 0.0
  %325 = vmatprep.subr.mxu0 0.0
  %326 = vmatpush2.msra.mxu0 0.0
  %327 = vmatprep.subr.mxu0 0.0
  %328 = vmatpush2.msra.mxu0 0.0
  %329 = vmatprep.subr.mxu0 0.0
  %330 = vmatpush2.msra.mxu0 0.0
  %331 = vmatprep.subr.mxu0 0.0
  %332 = vmatpush2.msra.mxu0 0.0
  %333 = vmatprep.subr.mxu0 0.0
  %334 = vmatpush2.msra.mxu0 0.0
  %335 = vmatprep.subr.mxu0 0.0
  %336 = vmatpush2.msra.mxu0 0.0
  %337 = vmatprep.subr.mxu0 0.0
  %338 = vmatpush2.msra.mxu0 0.0
  %339 = vmatprep.subr.mxu0 0.0
  %340 = vmatpush2.msra.mxu0 0.0
  %341 = vmatprep.subr.mxu0 0.0
  %342 = vmatpush2.msra.mxu0 0.0
  %343 = vmatprep.mubr.f32.mxu0 0.0
  %344 = vmatmul.mubr.f32.gmra.mxu0 %v277
  %v345 = vpop.f32.mrf.mxu0
  %v346 = vadd.f32 0.0, %v345
  %v347 = vpop.f32.mrf.mxu0
  %348 = vdwg.mxu0
  %v349 = vadd.f32 %v136, %v346
  %v350 = vmul.f32 %v349, 0.5
  %v351 = vsel %vm173, %v349, %v350
  %v352 = vtanh.pop %v351
  %v353 = vadd.f32 %v352, 1.0
  %v354 = vmul.f32 %v353, 0.5
  %v355 = vsel %vm173, %v352, %v354
  %v356 = vmul.f32 %v355, %v265
  %358 = vrot.lane.b32.xlu0 %v355, 64
  %v359 = vpop.permute.xlu0 %358
  %v361 = vmul.f32 %v355, %v359
  %363 = vrot.lane.b32.xlu0 %v361, 32
  %v364 = vpop.permute.xlu0 %363
  %v366 = vadd.f32 %v356, %v364
  %v367 = vtanh.pop %v366
  %369 = vrot.lane.b32.xlu0 %v367, 64
  %v370 = vpop.permute.xlu0 %369
  %v372 = vmul.f32 %v355, %v370
  %374 = vrot.lane.b32.xlu0 %v372, 32
  %v375 = vpop.permute.xlu0 %374
  %377 = vst.msk [vmem:[#allocation2 + $0x8] sm:$0xff] %vm174, %v375
  %v378 = vsel %vm174, %v375, 0
  %380 = vmatprep.subr.mxu0 0.0
  %381 = vmatpush1.msra.mxu0 0.0
  %382 = vmatprep.subr.mxu0 0.0
  %383 = vmatpush1.msra.mxu0 0.0
  %384 = vmatprep.subr.mxu0 0.0
  %385 = vmatpush1.msra.mxu0 0.0
  %386 = vmatprep.subr.mxu0 0.0
  %387 = vmatpush1.msra.mxu0 0.0
  %388 = vmatprep.subr.mxu0 0.0
  %389 = vmatpush1.msra.mxu0 0.0
  %390 = vmatprep.subr.mxu0 0.0
  %391 = vmatpush1.msra.mxu0 0.0
  %392 = vmatprep.subr.mxu0 0.0
  %393 = vmatpush1.msra.mxu0 0.0
  %394 = vmatprep.subr.mxu0 0.0
  %395 = vmatpush1.msra.mxu0 0.0
  %396 = vmatprep.subr.mxu0 0.0
  %397 = vmatpush1.msra.mxu0 0.0
  %398 = vmatprep.subr.mxu0 0.0
  %399 = vmatpush1.msra.mxu0 0.0
  %400 = vmatprep.subr.mxu0 0.0
  %401 = vmatpush1.msra.mxu0 0.0
  %402 = vmatprep.subr.mxu0 0.0
  %403 = vmatpush1.msra.mxu0 0.0
  %404 = vmatprep.subr.mxu0 0.0
  %405 = vmatpush1.msra.mxu0 %v22
  %406 = vmatprep.subr.mxu0 0.0
  %407 = vmatpush1.msra.mxu0 %v21
  %408 = vmatprep.subr.mxu0 0.0
  %409 = vmatpush1.msra.mxu0 %v20
  %410 = vmatprep.subr.mxu0 0.0
  %411 = vmatpush1.msra.mxu0 %v19
  %412 = vmatprep.subr.mxu0 0.0
  %413 = vmatpush2.msra.mxu0 0.0
  %414 = vmatprep.subr.mxu0 0.0
  %415 = vmatpush2.msra.mxu0 0.0
  %416 = vmatprep.subr.mxu0 0.0
  %417 = vmatpush2.msra.mxu0 0.0
  %418 = vmatprep.subr.mxu0 0.0
  %419 = vmatpush2.msra.mxu0 0.0
  %420 = vmatprep.subr.mxu0 0.0
  %421 = vmatpush2.msra.mxu0 0.0
  %422 = vmatprep.subr.mxu0 0.0
  %423 = vmatpush2.msra.mxu0 0.0
  %424 = vmatprep.subr.mxu0 0.0
  %425 = vmatpush2.msra.mxu0 0.0
  %426 = vmatprep.subr.mxu0 0.0
  %427 = vmatpush2.msra.mxu0 0.0
  %428 = vmatprep.subr.mxu0 0.0
  %429 = vmatpush2.msra.mxu0 0.0
  %430 = vmatprep.subr.mxu0 0.0
  %431 = vmatpush2.msra.mxu0 0.0
  %432 = vmatprep.subr.mxu0 0.0
  %433 = vmatpush2.msra.mxu0 0.0
  %434 = vmatprep.subr.mxu0 0.0
  %435 = vmatpush2.msra.mxu0 0.0
  %436 = vmatprep.subr.mxu0 0.0
  %437 = vmatpush2.msra.mxu0 0.0
  %438 = vmatprep.subr.mxu0 0.0
  %439 = vmatpush2.msra.mxu0 0.0
  %440 = vmatprep.subr.mxu0 0.0
  %441 = vmatpush2.msra.mxu0 0.0
  %442 = vmatprep.subr.mxu0 0.0
  %443 = vmatpush2.msra.mxu0 0.0
  %444 = vmatprep.mubr.f32.mxu0 0.0
  %445 = vmatmul.mubr.f32.gmra.mxu0 %v378
  %v446 = vpop.f32.mrf.mxu0
  %v447 = vadd.f32 0.0, %v446
  %v448 = vpop.f32.mrf.mxu0
  %449 = vdwg.mxu0
  %v450 = vadd.f32 %v141, %v447
  %v451 = vmul.f32 %v450, 0.5
  %v452 = vsel %vm173, %v450, %v451
  %v453 = vtanh.pop %v452
  %v454 = vadd.f32 %v453, 1.0
  %v455 = vmul.f32 %v454, 0.5
  %v456 = vsel %vm173, %v453, %v455
  %v457 = vmul.f32 %v456, %v366
  %459 = vrot.lane.b32.xlu0 %v456, 64
  %v460 = vpop.permute.xlu0 %459
  %v462 = vmul.f32 %v456, %v460
  %464 = vrot.lane.b32.xlu0 %v462, 32
  %v465 = vpop.permute.xlu0 %464
  %v467 = vadd.f32 %v457, %v465
  %v468 = vtanh.pop %v467
  %470 = vrot.lane.b32.xlu0 %v468, 64
  %v471 = vpop.permute.xlu0 %470
  %v473 = vmul.f32 %v456, %v471
  %475 = vrot.lane.b32.xlu0 %v473, 32
  %v476 = vpop.permute.xlu0 %475
  %478 = vst.msk [vmem:[#allocation2 + $0x10] sm:$0xff] %vm174, %v476
  %v479 = vsel %vm174, %v476, 0
  %481 = vmatprep.subr.mxu0 0.0
  %482 = vmatpush1.msra.mxu0 0.0
  %483 = vmatprep.subr.mxu0 0.0
  %484 = vmatpush1.msra.mxu0 0.0
  %485 = vmatprep.subr.mxu0 0.0
  %486 = vmatpush1.msra.mxu0 0.0
  %487 = vmatprep.subr.mxu0 0.0
  %488 = vmatpush1.msra.mxu0 0.0
  %489 = vmatprep.subr.mxu0 0.0
  %490 = vmatpush1.msra.mxu0 0.0
  %491 = vmatprep.subr.mxu0 0.0
  %492 = vmatpush1.msra.mxu0 0.0
  %493 = vmatprep.subr.mxu0 0.0
  %494 = vmatpush1.msra.mxu0 0.0
  %495 = vmatprep.subr.mxu0 0.0
  %496 = vmatpush1.msra.mxu0 0.0
  %497 = vmatprep.subr.mxu0 0.0
  %498 = vmatpush1.msra.mxu0 0.0
  %499 = vmatprep.subr.mxu0 0.0
  %500 = vmatpush1.msra.mxu0 0.0
  %501 = vmatprep.subr.mxu0 0.0
  %502 = vmatpush1.msra.mxu0 0.0
  %503 = vmatprep.subr.mxu0 0.0
  %504 = vmatpush1.msra.mxu0 0.0
  %505 = vmatprep.subr.mxu0 0.0
  %506 = vmatpush1.msra.mxu0 %v22
  %507 = vmatprep.subr.mxu0 0.0
  %508 = vmatpush1.msra.mxu0 %v21
  %509 = vmatprep.subr.mxu0 0.0
  %510 = vmatpush1.msra.mxu0 %v20
  %511 = vmatprep.subr.mxu0 0.0
  %512 = vmatpush1.msra.mxu0 %v19
  %513 = vmatprep.subr.mxu0 0.0
  %514 = vmatpush2.msra.mxu0 0.0
  %515 = vmatprep.subr.mxu0 0.0
  %516 = vmatpush2.msra.mxu0 0.0
  %517 = vmatprep.subr.mxu0 0.0
  %518 = vmatpush2.msra.mxu0 0.0
  %519 = vmatprep.subr.mxu0 0.0
  %520 = vmatpush2.msra.mxu0 0.0
  %521 = vmatprep.subr.mxu0 0.0
  %522 = vmatpush2.msra.mxu0 0.0
  %523 = vmatprep.subr.mxu0 0.0
  %524 = vmatpush2.msra.mxu0 0.0
  %525 = vmatprep.subr.mxu0 0.0
  %526 = vmatpush2.msra.mxu0 0.0
  %527 = vmatprep.subr.mxu0 0.0
  %528 = vmatpush2.msra.mxu0 0.0
  %529 = vmatprep.subr.mxu0 0.0
  %530 = vmatpush2.msra.mxu0 0.0
  %531 = vmatprep.subr.mxu0 0.0
  %532 = vmatpush2.msra.mxu0 0.0
  %533 = vmatprep.subr.mxu0 0.0
  %534 = vmatpush2.msra.mxu0 0.0
  %535 = vmatprep.subr.mxu0 0.0
  %536 = vmatpush2.msra.mxu0 0.0
  %537 = vmatprep.subr.mxu0 0.0
  %538 = vmatpush2.msra.mxu0 0.0
  %539 = vmatprep.subr.mxu0 0.0
  %540 = vmatpush2.msra.mxu0 0.0
  %541 = vmatprep.subr.mxu0 0.0
  %542 = vmatpush2.msra.mxu0 0.0
  %543 = vmatprep.subr.mxu0 0.0
  %544 = vmatpush2.msra.mxu0 0.0
  %545 = vmatprep.mubr.f32.mxu0 0.0
  %546 = vmatmul.mubr.f32.gmra.mxu0 %v479
  %v547 = vpop.f32.mrf.mxu0
  %v548 = vadd.f32 0.0, %v547
  %v549 = vpop.f32.mrf.mxu0
  %550 = vdwg.mxu0
  %v551 = vadd.f32 %v146, %v548
  %v552 = vmul.f32 %v551, 0.5
  %v553 = vsel %vm173, %v551, %v552
  %v554 = vtanh.pop %v553
  %v555 = vadd.f32 %v554, 1.0
  %v556 = vmul.f32 %v555, 0.5
  %v557 = vsel %vm173, %v554, %v556
  %v558 = vmul.f32 %v557, %v467
  %560 = vrot.lane.b32.xlu0 %v557, 64
  %v561 = vpop.permute.xlu0 %560
  %v563 = vmul.f32 %v557, %v561
  %565 = vrot.lane.b32.xlu0 %v563, 32
  %v566 = vpop.permute.xlu0 %565
  %v568 = vadd.f32 %v558, %v566
  %v569 = vtanh.pop %v568
  %571 = vrot.lane.b32.xlu0 %v569, 64
  %v572 = vpop.permute.xlu0 %571
  %v574 = vmul.f32 %v557, %v572
  %576 = vrot.lane.b32.xlu0 %v574, 32
  %v577 = vpop.permute.xlu0 %576
  %579 = vst.msk [vmem:[#allocation2 + $0x18] sm:$0xff] %vm174, %v577
  %v580 = vsel %vm174, %v577, 0
  %582 = vmatprep.subr.mxu0 0.0
  %583 = vmatpush1.msra.mxu0 0.0
  %584 = vmatprep.subr.mxu0 0.0
  %585 = vmatpush1.msra.mxu0 0.0
  %586 = vmatprep.subr.mxu0 0.0
  %587 = vmatpush1.msra.mxu0 0.0
  %588 = vmatprep.subr.mxu0 0.0
  %589 = vmatpush1.msra.mxu0 0.0
  %590 = vmatprep.subr.mxu0 0.0
  %591 = vmatpush1.msra.mxu0 0.0
  %592 = vmatprep.subr.mxu0 0.0
  %593 = vmatpush1.msra.mxu0 0.0
  %594 = vmatprep.subr.mxu0 0.0
  %595 = vmatpush1.msra.mxu0 0.0
  %596 = vmatprep.subr.mxu0 0.0
  %597 = vmatpush1.msra.mxu0 0.0
  %598 = vmatprep.subr.mxu0 0.0
  %599 = vmatpush1.msra.mxu0 0.0
  %600 = vmatprep.subr.mxu0 0.0
  %601 = vmatpush1.msra.mxu0 0.0
  %602 = vmatprep.subr.mxu0 0.0
  %603 = vmatpush1.msra.mxu0 0.0
  %604 = vmatprep.subr.mxu0 0.0
  %605 = vmatpush1.msra.mxu0 0.0
  %606 = vmatprep.subr.mxu0 0.0
  %607 = vmatpush1.msra.mxu0 %v22
  %608 = vmatprep.subr.mxu0 0.0
  %609 = vmatpush1.msra.mxu0 %v21
  %610 = vmatprep.subr.mxu0 0.0
  %611 = vmatpush1.msra.mxu0 %v20
  %612 = vmatprep.subr.mxu0 0.0
  %613 = vmatpush1.msra.mxu0 %v19
  %614 = vmatprep.subr.mxu0 0.0
  %615 = vmatpush2.msra.mxu0 0.0
  %616 = vmatprep.subr.mxu0 0.0
  %617 = vmatpush2.msra.mxu0 0.0
  %618 = vmatprep.subr.mxu0 0.0
  %619 = vmatpush2.msra.mxu0 0.0
  %620 = vmatprep.subr.mxu0 0.0
  %621 = vmatpush2.msra.mxu0 0.0
  %622 = vmatprep.subr.mxu0 0.0
  %623 = vmatpush2.msra.mxu0 0.0
  %624 = vmatprep.subr.mxu0 0.0
  %625 = vmatpush2.msra.mxu0 0.0
  %626 = vmatprep.subr.mxu0 0.0
  %627 = vmatpush2.msra.mxu0 0.0
  %628 = vmatprep.subr.mxu0 0.0
  %629 = vmatpush2.msra.mxu0 0.0
  %630 = vmatprep.subr.mxu0 0.0
  %631 = vmatpush2.msra.mxu0 0.0
  %632 = vmatprep.subr.mxu0 0.0
  %633 = vmatpush2.msra.mxu0 0.0
  %634 = vmatprep.subr.mxu0 0.0
  %635 = vmatpush2.msra.mxu0 0.0
  %636 = vmatprep.subr.mxu0 0.0
  %637 = vmatpush2.msra.mxu0 0.0
  %638 = vmatprep.subr.mxu0 0.0
  %639 = vmatpush2.msra.mxu0 0.0
  %640 = vmatprep.subr.mxu0 0.0
  %641 = vmatpush2.msra.mxu0 0.0
  %642 = vmatprep.subr.mxu0 0.0
  %643 = vmatpush2.msra.mxu0 0.0
  %644 = vmatprep.subr.mxu0 0.0
  %645 = vmatpush2.msra.mxu0 0.0
  %646 = vmatprep.mubr.f32.mxu0 0.0
  %647 = vmatmul.mubr.f32.gmra.mxu0 %v580
  %v648 = vpop.f32.mrf.mxu0
  %v649 = vadd.f32 0.0, %v648
  %v650 = vpop.f32.mrf.mxu0
  %651 = vdwg.mxu0
  %v652 = vadd.f32 %v151, %v649
  %v653 = vmul.f32 %v652, 0.5
  %v654 = vsel %vm173, %v652, %v653
  %v655 = vtanh.pop %v654
  %v656 = vadd.f32 %v655, 1.0
  %v657 = vmul.f32 %v656, 0.5
  %v658 = vsel %vm173, %v655, %v657
  %v659 = vmul.f32 %v658, %v568
  %661 = vrot.lane.b32.xlu0 %v658, 64
  %v662 = vpop.permute.xlu0 %661
  %v664 = vmul.f32 %v658, %v662
  %666 = vrot.lane.b32.xlu0 %v664, 32
  %v667 = vpop.permute.xlu0 %666
  %v669 = vadd.f32 %v659, %v667
  %v670 = vtanh.pop %v669
  %672 = vrot.lane.b32.xlu0 %v670, 64
  %v673 = vpop.permute.xlu0 %672
  %v675 = vmul.f32 %v658, %v673
  %677 = vrot.lane.b32.xlu0 %v675, 32
  %v678 = vpop.permute.xlu0 %677
  %680 = vst.msk [vmem:[#allocation2 + $0x20] sm:$0xff] %vm174, %v678
  %v681 = vsel %vm174, %v678, 0
  %683 = vmatprep.subr.mxu0 0.0
  %684 = vmatpush1.msra.mxu0 0.0
  %685 = vmatprep.subr.mxu0 0.0
  %686 = vmatpush1.msra.mxu0 0.0
  %687 = vmatprep.subr.mxu0 0.0
  %688 = vmatpush1.msra.mxu0 0.0
  %689 = vmatprep.subr.mxu0 0.0
  %690 = vmatpush1.msra.mxu0 0.0
  %691 = vmatprep.subr.mxu0 0.0
  %692 = vmatpush1.msra.mxu0 0.0
  %693 = vmatprep.subr.mxu0 0.0
  %694 = vmatpush1.msra.mxu0 0.0
  %695 = vmatprep.subr.mxu0 0.0
  %696 = vmatpush1.msra.mxu0 0.0
  %697 = vmatprep.subr.mxu0 0.0
  %698 = vmatpush1.msra.mxu0 0.0
  %699 = vmatprep.subr.mxu0 0.0
  %700 = vmatpush1.msra.mxu0 0.0
  %701 = vmatprep.subr.mxu0 0.0
  %702 = vmatpush1.msra.mxu0 0.0
  %703 = vmatprep.subr.mxu0 0.0
  %704 = vmatpush1.msra.mxu0 0.0
  %705 = vmatprep.subr.mxu0 0.0
  %706 = vmatpush1.msra.mxu0 0.0
  %707 = vmatprep.subr.mxu0 0.0
  %708 = vmatpush1.msra.mxu0 %v22
  %709 = vmatprep.subr.mxu0 0.0
  %710 = vmatpush1.msra.mxu0 %v21
  %711 = vmatprep.subr.mxu0 0.0
  %712 = vmatpush1.msra.mxu0 %v20
  %713 = vmatprep.subr.mxu0 0.0
  %714 = vmatpush1.msra.mxu0 %v19
  %715 = vmatprep.subr.mxu0 0.0
  %716 = vmatpush2.msra.mxu0 0.0
  %717 = vmatprep.subr.mxu0 0.0
  %718 = vmatpush2.msra.mxu0 0.0
  %719 = vmatprep.subr.mxu0 0.0
  %720 = vmatpush2.msra.mxu0 0.0
  %721 = vmatprep.subr.mxu0 0.0
  %722 = vmatpush2.msra.mxu0 0.0
  %723 = vmatprep.subr.mxu0 0.0
  %724 = vmatpush2.msra.mxu0 0.0
  %725 = vmatprep.subr.mxu0 0.0
  %726 = vmatpush2.msra.mxu0 0.0
  %727 = vmatprep.subr.mxu0 0.0
  %728 = vmatpush2.msra.mxu0 0.0
  %729 = vmatprep.subr.mxu0 0.0
  %730 = vmatpush2.msra.mxu0 0.0
  %731 = vmatprep.subr.mxu0 0.0
  %732 = vmatpush2.msra.mxu0 0.0
  %733 = vmatprep.subr.mxu0 0.0
  %734 = vmatpush2.msra.mxu0 0.0
  %735 = vmatprep.subr.mxu0 0.0
  %736 = vmatpush2.msra.mxu0 0.0
  %737 = vmatprep.subr.mxu0 0.0
  %738 = vmatpush2.msra.mxu0 0.0
  %739 = vmatprep.subr.mxu0 0.0
  %740 = vmatpush2.msra.mxu0 0.0
  %741 = vmatprep.subr.mxu0 0.0
  %742 = vmatpush2.msra.mxu0 0.0
  %743 = vmatprep.subr.mxu0 0.0
  %744 = vmatpush2.msra.mxu0 0.0
  %745 = vmatprep.subr.mxu0 0.0
  %746 = vmatpush2.msra.mxu0 0.0
  %747 = vmatprep.mubr.f32.mxu0 0.0
  %748 = vmatmul.mubr.f32.gmra.mxu0 %v681
  %v749 = vpop.f32.mrf.mxu0
  %v750 = vadd.f32 0.0, %v749
  %v751 = vpop.f32.mrf.mxu0
  %752 = vdwg.mxu0
  %v753 = vadd.f32 %v156, %v750
  %v754 = vmul.f32 %v753, 0.5
  %v755 = vsel %vm173, %v753, %v754
  %v756 = vtanh.pop %v755
  %v757 = vadd.f32 %v756, 1.0
  %v758 = vmul.f32 %v757, 0.5
  %v759 = vsel %vm173, %v756, %v758
  %v760 = vmul.f32 %v759, %v669
  %762 = vrot.lane.b32.xlu0 %v759, 64
  %v763 = vpop.permute.xlu0 %762
  %v765 = vmul.f32 %v759, %v763
  %767 = vrot.lane.b32.xlu0 %v765, 32
  %v768 = vpop.permute.xlu0 %767
  %v770 = vadd.f32 %v760, %v768
  %v771 = vtanh.pop %v770
  %773 = vrot.lane.b32.xlu0 %v771, 64
  %v774 = vpop.permute.xlu0 %773
  %v776 = vmul.f32 %v759, %v774
  %778 = vrot.lane.b32.xlu0 %v776, 32
  %v779 = vpop.permute.xlu0 %778
  %781 = vst.msk [vmem:[#allocation2 + $0x28] sm:$0xff] %vm174, %v779
  %v782 = vsel %vm174, %v779, 0
  %784 = vmatprep.subr.mxu0 0.0
  %785 = vmatpush1.msra.mxu0 0.0
  %786 = vmatprep.subr.mxu0 0.0
  %787 = vmatpush1.msra.mxu0 0.0
  %788 = vmatprep.subr.mxu0 0.0
  %789 = vmatpush1.msra.mxu0 0.0
  %790 = vmatprep.subr.mxu0 0.0
  %791 = vmatpush1.msra.mxu0 0.0
  %792 = vmatprep.subr.mxu0 0.0
  %793 = vmatpush1.msra.mxu0 0.0
  %794 = vmatprep.subr.mxu0 0.0
  %795 = vmatpush1.msra.mxu0 0.0
  %796 = vmatprep.subr.mxu0 0.0
  %797 = vmatpush1.msra.mxu0 0.0
  %798 = vmatprep.subr.mxu0 0.0
  %799 = vmatpush1.msra.mxu0 0.0
  %800 = vmatprep.subr.mxu0 0.0
  %801 = vmatpush1.msra.mxu0 0.0
  %802 = vmatprep.subr.mxu0 0.0
  %803 = vmatpush1.msra.mxu0 0.0
  %804 = vmatprep.subr.mxu0 0.0
  %805 = vmatpush1.msra.mxu0 0.0
  %806 = vmatprep.subr.mxu0 0.0
  %807 = vmatpush1.msra.mxu0 0.0
  %808 = vmatprep.subr.mxu0 0.0
  %809 = vmatpush1.msra.mxu0 %v22
  %810 = vmatprep.subr.mxu0 0.0
  %811 = vmatpush1.msra.mxu0 %v21
  %812 = vmatprep.subr.mxu0 0.0
  %813 = vmatpush1.msra.mxu0 %v20
  %814 = vmatprep.subr.mxu0 0.0
  %815 = vmatpush1.msra.mxu0 %v19
  %816 = vmatprep.subr.mxu0 0.0
  %817 = vmatpush2.msra.mxu0 0.0
  %818 = vmatprep.subr.mxu0 0.0
  %819 = vmatpush2.msra.mxu0 0.0
  %820 = vmatprep.subr.mxu0 0.0
  %821 = vmatpush2.msra.mxu0 0.0
  %822 = vmatprep.subr.mxu0 0.0
  %823 = vmatpush2.msra.mxu0 0.0
  %824 = vmatprep.subr.mxu0 0.0
  %825 = vmatpush2.msra.mxu0 0.0
  %826 = vmatprep.subr.mxu0 0.0
  %827 = vmatpush2.msra.mxu0 0.0
  %828 = vmatprep.subr.mxu0 0.0
  %829 = vmatpush2.msra.mxu0 0.0
  %830 = vmatprep.subr.mxu0 0.0
  %831 = vmatpush2.msra.mxu0 0.0
  %832 = vmatprep.subr.mxu0 0.0
  %833 = vmatpush2.msra.mxu0 0.0
  %834 = vmatprep.subr.mxu0 0.0
  %835 = vmatpush2.msra.mxu0 0.0
  %836 = vmatprep.subr.mxu0 0.0
  %837 = vmatpush2.msra.mxu0 0.0
  %838 = vmatprep.subr.mxu0 0.0
  %839 = vmatpush2.msra.mxu0 0.0
  %840 = vmatprep.subr.mxu0 0.0
  %841 = vmatpush2.msra.mxu0 0.0
  %842 = vmatprep.subr.mxu0 0.0
  %843 = vmatpush2.msra.mxu0 0.0
  %844 = vmatprep.subr.mxu0 0.0
  %845 = vmatpush2.msra.mxu0 0.0
  %846 = vmatprep.subr.mxu0 0.0
  %847 = vmatpush2.msra.mxu0 0.0
  %848 = vmatprep.mubr.f32.mxu0 0.0
  %849 = vmatmul.mubr.f32.gmra.mxu0 %v782
  %v850 = vpop.f32.mrf.mxu0
  %v851 = vadd.f32 0.0, %v850
  %v852 = vpop.f32.mrf.mxu0
  %853 = vdwg.mxu0
  %v854 = vadd.f32 %v161, %v851
  %v855 = vmul.f32 %v854, 0.5
  %v856 = vsel %vm173, %v854, %v855
  %v857 = vtanh.pop %v856
  %v858 = vadd.f32 %v857, 1.0
  %v859 = vmul.f32 %v858, 0.5
  %v860 = vsel %vm173, %v857, %v859
  %v861 = vmul.f32 %v860, %v770
  %863 = vrot.lane.b32.xlu0 %v860, 64
  %v864 = vpop.permute.xlu0 %863
  %v866 = vmul.f32 %v860, %v864
  %868 = vrot.lane.b32.xlu0 %v866, 32
  %v869 = vpop.permute.xlu0 %868
  %v871 = vadd.f32 %v861, %v869
  %v872 = vtanh.pop %v871
  %874 = vrot.lane.b32.xlu0 %v872, 64
  %v875 = vpop.permute.xlu0 %874
  %v877 = vmul.f32 %v860, %v875
  %879 = vrot.lane.b32.xlu0 %v877, 32
  %v880 = vpop.permute.xlu0 %879
  %882 = vst.msk [vmem:[#allocation2 + $0x30] sm:$0xff] %vm174, %v880
  %v883 = vsel %vm174, %v880, 0
  %885 = vmatprep.subr.mxu0 0.0
  %886 = vmatpush1.msra.mxu0 0.0
  %887 = vmatprep.subr.mxu0 0.0
  %888 = vmatpush1.msra.mxu0 0.0
  %889 = vmatprep.subr.mxu0 0.0
  %890 = vmatpush1.msra.mxu0 0.0
  %891 = vmatprep.subr.mxu0 0.0
  %892 = vmatpush1.msra.mxu0 0.0
  %893 = vmatprep.subr.mxu0 0.0
  %894 = vmatpush1.msra.mxu0 0.0
  %895 = vmatprep.subr.mxu0 0.0
  %896 = vmatpush1.msra.mxu0 0.0
  %897 = vmatprep.subr.mxu0 0.0
  %898 = vmatpush1.msra.mxu0 0.0
  %899 = vmatprep.subr.mxu0 0.0
  %900 = vmatpush1.msra.mxu0 0.0
  %901 = vmatprep.subr.mxu0 0.0
  %902 = vmatpush1.msra.mxu0 0.0
  %903 = vmatprep.subr.mxu0 0.0
  %904 = vmatpush1.msra.mxu0 0.0
  %905 = vmatprep.subr.mxu0 0.0
  %906 = vmatpush1.msra.mxu0 0.0
  %907 = vmatprep.subr.mxu0 0.0
  %908 = vmatpush1.msra.mxu0 0.0
  %909 = vmatprep.subr.mxu0 0.0
  %910 = vmatpush1.msra.mxu0 %v22
  %911 = vmatprep.subr.mxu0 0.0
  %912 = vmatpush1.msra.mxu0 %v21
  %913 = vmatprep.subr.mxu0 0.0
  %914 = vmatpush1.msra.mxu0 %v20
  %915 = vmatprep.subr.mxu0 0.0
  %916 = vmatpush1.msra.mxu0 %v19
  %917 = vmatprep.subr.mxu0 0.0
  %918 = vmatpush2.msra.mxu0 0.0
  %919 = vmatprep.subr.mxu0 0.0
  %920 = vmatpush2.msra.mxu0 0.0
  %921 = vmatprep.subr.mxu0 0.0
  %922 = vmatpush2.msra.mxu0 0.0
  %923 = vmatprep.subr.mxu0 0.0
  %924 = vmatpush2.msra.mxu0 0.0
  %925 = vmatprep.subr.mxu0 0.0
  %926 = vmatpush2.msra.mxu0 0.0
  %927 = vmatprep.subr.mxu0 0.0
  %928 = vmatpush2.msra.mxu0 0.0
  %929 = vmatprep.subr.mxu0 0.0
  %930 = vmatpush2.msra.mxu0 0.0
  %931 = vmatprep.subr.mxu0 0.0
  %932 = vmatpush2.msra.mxu0 0.0
  %933 = vmatprep.subr.mxu0 0.0
  %934 = vmatpush2.msra.mxu0 0.0
  %935 = vmatprep.subr.mxu0 0.0
  %936 = vmatpush2.msra.mxu0 0.0
  %937 = vmatprep.subr.mxu0 0.0
  %938 = vmatpush2.msra.mxu0 0.0
  %939 = vmatprep.subr.mxu0 0.0
  %940 = vmatpush2.msra.mxu0 0.0
  %941 = vmatprep.subr.mxu0 0.0
  %942 = vmatpush2.msra.mxu0 0.0
  %943 = vmatprep.subr.mxu0 0.0
  %944 = vmatpush2.msra.mxu0 0.0
  %945 = vmatprep.subr.mxu0 0.0
  %946 = vmatpush2.msra.mxu0 0.0
  %947 = vmatprep.subr.mxu0 0.0
  %948 = vmatpush2.msra.mxu0 0.0
  %949 = vmatprep.mubr.f32.mxu0 0.0
  %950 = vmatmul.mubr.f32.gmra.mxu0 %v883
  %v951 = vpop.f32.mrf.mxu0
  %v952 = vadd.f32 0.0, %v951
  %v953 = vpop.f32.mrf.mxu0
  %954 = vdwg.mxu0
  %v955 = vadd.f32 %v166, %v952
  %v956 = vmul.f32 %v955, 0.5
  %v957 = vsel %vm173, %v955, %v956
  %v958 = vtanh.pop %v957
  %v959 = vadd.f32 %v958, 1.0
  %v960 = vmul.f32 %v959, 0.5
  %v961 = vsel %vm173, %v958, %v960
  %v962 = vmul.f32 %v961, %v871
  %964 = vrot.lane.b32.xlu0 %v961, 64
  %v965 = vpop.permute.xlu0 %964
  %v967 = vmul.f32 %v961, %v965
  %969 = vrot.lane.b32.xlu0 %v967, 32
  %v970 = vpop.permute.xlu0 %969
  %v972 = vadd.f32 %v962, %v970
  %v973 = vtanh.pop %v972
  %975 = vrot.lane.b32.xlu0 %v973, 64
  %v976 = vpop.permute.xlu0 %975
  %v978 = vmul.f32 %v961, %v976
  %980 = vrot.lane.b32.xlu0 %v978, 32
  %v981 = vpop.permute.xlu0 %980
  %983 = vst.msk [vmem:[#allocation2 + $0x38] sm:$0xff] %vm174, %v981
  %984 = vst.msk [vmem:[%s4] sm:$0xff] %vm174, %v981
  %986 = vrot.lane.b32.xlu0 %v972, 96
  %v987 = vpop.permute.xlu0 %986
  %989 = vst.msk [vmem:[%s5] sm:$0xff] %vm174, %v987
  %v990 = vld [vmem:[%s2] sm:$0xff]
  %v991 = vld [vmem:[%s2 + $0x8] sm:$0xff]
  %v992 = vld [vmem:[%s2 + $0x10] sm:$0xff]
  %v993 = vld [vmem:[%s2 + $0x18] sm:$0xff]
  %v994 = vld [vmem:[%s2 + $0x20] sm:$0x1]
  %v995 = vld [vmem:[%s2 + $0x21] sm:$0x1]
  %v996 = vld [vmem:[%s2 + $0x22] sm:$0x1]
  %v997 = vld [vmem:[#allocation2] sm:$0xff]
  %v998 = vld [vmem:[#allocation2 + $0x8] sm:$0xff]
  %v999 = vld [vmem:[#allocation2 + $0x10] sm:$0xff]
  %v1000 = vld [vmem:[#allocation2 + $0x18] sm:$0xff]
  %v1001 = vld [vmem:[#allocation2 + $0x20] sm:$0xff]
  %v1002 = vld [vmem:[#allocation2 + $0x28] sm:$0xff]
  %v1003 = vld [vmem:[#allocation2 + $0x30] sm:$0xff]
  %v1004 = vld [vmem:[#allocation2 + $0x38] sm:$0xff]
  %v1005 = vlaneseq
  %v1006 = vshrl.u32 %v1005, 7
  %v1007 = vsub.s32 0, %v1006
  %v1008 = vrot.slane %v994, %v1007
  %v1010 = vsel %vm174, %v997, 0
  %v1013 = vsel %vm174, %v998, 0
  %v1016 = vsel %vm174, %v999, 0
  %v1019 = vsel %vm174, %v1000, 0
  %v1022 = vsel %vm174, %v1001, 0
  %v1025 = vsel %vm174, %v1002, 0
  %v1028 = vsel %vm174, %v1003, 0
  %v1031 = vsel %vm174, %v1004, 0
  %1033 = vmatprep.subr.mxu0 0.0
  %1034 = vmatpush1.msra.mxu0 0.0
  %1035 = vmatprep.subr.mxu0 0.0
  %1036 = vmatpush1.msra.mxu0 0.0
  %1037 = vmatprep.subr.mxu0 0.0
  %1038 = vmatpush1.msra.mxu0 0.0
  %1039 = vmatprep.subr.mxu0 0.0
  %1040 = vmatpush1.msra.mxu0 0.0
  %1041 = vmatprep.subr.mxu0 0.0
  %1042 = vmatpush1.msra.mxu0 0.0
  %1043 = vmatprep.subr.mxu0 0.0
  %1044 = vmatpush1.msra.mxu0 0.0
  %1045 = vmatprep.subr.mxu0 0.0
  %1046 = vmatpush1.msra.mxu0 0.0
  %1047 = vmatprep.subr.mxu0 0.0
  %1048 = vmatpush1.msra.mxu0 0.0
  %1049 = vmatprep.subr.mxu0 0.0
  %1050 = vmatpush1.msra.mxu0 0.0
  %1051 = vmatprep.subr.mxu0 0.0
  %1052 = vmatpush1.msra.mxu0 0.0
  %1053 = vmatprep.subr.mxu0 0.0
  %1054 = vmatpush1.msra.mxu0 0.0
  %1055 = vmatprep.subr.mxu0 0.0
  %1056 = vmatpush1.msra.mxu0 0.0
  %1057 = vmatprep.subr.mxu0 0.0
  %1058 = vmatpush1.msra.mxu0 %v993
  %1059 = vmatprep.subr.mxu0 0.0
  %1060 = vmatpush1.msra.mxu0 %v992
  %1061 = vmatprep.subr.mxu0 0.0
  %1062 = vmatpush1.msra.mxu0 %v991
  %1063 = vmatprep.subr.mxu0 0.0
  %1064 = vmatpush1.msra.mxu0 %v990
  %1065 = vmatprep.subr.mxu0 0.0
  %1066 = vmatpush2.msra.mxu0 0.0
  %1067 = vmatprep.subr.mxu0 0.0
  %1068 = vmatpush2.msra.mxu0 0.0
  %1069 = vmatprep.subr.mxu0 0.0
  %1070 = vmatpush2.msra.mxu0 0.0
  %1071 = vmatprep.subr.mxu0 0.0
  %1072 = vmatpush2.msra.mxu0 0.0
  %1073 = vmatprep.subr.mxu0 0.0
  %1074 = vmatpush2.msra.mxu0 0.0
  %1075 = vmatprep.subr.mxu0 0.0
  %1076 = vmatpush2.msra.mxu0 0.0
  %1077 = vmatprep.subr.mxu0 0.0
  %1078 = vmatpush2.msra.mxu0 0.0
  %1079 = vmatprep.subr.mxu0 0.0
  %1080 = vmatpush2.msra.mxu0 0.0
  %1081 = vmatprep.subr.mxu0 0.0
  %1082 = vmatpush2.msra.mxu0 0.0
  %1083 = vmatprep.subr.mxu0 0.0
  %1084 = vmatpush2.msra.mxu0 0.0
  %1085 = vmatprep.subr.mxu0 0.0
  %1086 = vmatpush2.msra.mxu0 0.0
  %1087 = vmatprep.subr.mxu0 0.0
  %1088 = vmatpush2.msra.mxu0 0.0
  %1089 = vmatprep.subr.mxu0 0.0
  %1090 = vmatpush2.msra.mxu0 0.0
  %1091 = vmatprep.subr.mxu0 0.0
  %1092 = vmatpush2.msra.mxu0 0.0
  %1093 = vmatprep.subr.mxu0 0.0
  %1094 = vmatpush2.msra.mxu0 0.0
  %1095 = vmatprep.subr.mxu0 0.0
  %1096 = vmatpush2.msra.mxu0 0.0
  %1097 = vmatprep.mubr.f32.mxu0 0.0
  %1098 = vmatmul.mubr.f32.gmra.mxu0 %v1010
  %v1099 = vpop.f32.mrf.mxu0
  %v1100 = vadd.f32 %v1008, %v1099
  %v1101 = vpop.f32.mrf.mxu0
  %1102 = vmatprep.mubr.f32.mxu0 0.0
  %1103 = vmatmul.mubr.f32.gmra.mxu0 %v1013
  %v1104 = vpop.f32.mrf.mxu0
  %v1105 = vadd.f32 %v1008, %v1104
  %v1106 = vpop.f32.mrf.mxu0
  %1107 = vmatprep.mubr.f32.mxu0 0.0
  %1108 = vmatmul.mubr.f32.gmra.mxu0 %v1016
  %v1109 = vpop.f32.mrf.mxu0
  %v1110 = vadd.f32 %v1008, %v1109
  %v1111 = vpop.f32.mrf.mxu0
  %1112 = vmatprep.mubr.f32.mxu0 0.0
  %1113 = vmatmul.mubr.f32.gmra.mxu0 %v1019
  %v1114 = vpop.f32.mrf.mxu0
  %v1115 = vadd.f32 %v1008, %v1114
  %v1116 = vpop.f32.mrf.mxu0
  %1117 = vmatprep.mubr.f32.mxu0 0.0
  %1118 = vmatmul.mubr.f32.gmra.mxu0 %v1022
  %v1119 = vpop.f32.mrf.mxu0
  %v1120 = vadd.f32 %v1008, %v1119
  %v1121 = vpop.f32.mrf.mxu0
  %1122 = vmatprep.mubr.f32.mxu0 0.0
  %1123 = vmatmul.mubr.f32.gmra.mxu0 %v1025
  %v1124 = vpop.f32.mrf.mxu0
  %v1125 = vadd.f32 %v1008, %v1124
  %v1126 = vpop.f32.mrf.mxu0
  %1127 = vmatprep.mubr.f32.mxu0 0.0
  %1128 = vmatmul.mubr.f32.gmra.mxu0 %v1028
  %v1129 = vpop.f32.mrf.mxu0
  %v1130 = vadd.f32 %v1008, %v1129
  %v1131 = vpop.f32.mrf.mxu0
  %1132 = vmatprep.mubr.f32.mxu0 0.0
  %1133 = vmatmul.mubr.f32.gmra.mxu0 %v1031
  %v1134 = vpop.f32.mrf.mxu0
  %v1135 = vadd.f32 %v1008, %v1134
  %v1136 = vpop.f32.mrf.mxu0
  %1137 = vdwg.mxu0
  %v1138 = vmax.f32 %v1100, 0.0
  %v1139 = vmax.f32 %v1105, 0.0
  %v1140 = vmax.f32 %v1110, 0.0
  %v1141 = vmax.f32 %v1115, 0.0
  %v1142 = vmax.f32 %v1120, 0.0
  %v1143 = vmax.f32 %v1125, 0.0
  %v1144 = vmax.f32 %v1130, 0.0
  %v1145 = vmax.f32 %v1135, 0.0
  %v1146 = vlaneseq
  %v1147 = vshrl.u32 %v1146, 7
  %v1148 = vsub.s32 0, %v1147
  %v1149 = vrot.slane %v995, %v1148
  %v1150 = vmul.f32 %v1138, %v1149
  %v1151 = vmul.f32 %v1139, %v1149
  %v1152 = vmul.f32 %v1140, %v1149
  %v1153 = vmul.f32 %v1141, %v1149
  %v1154 = vmul.f32 %v1142, %v1149
  %v1155 = vmul.f32 %v1143, %v1149
  %v1156 = vmul.f32 %v1144, %v1149
  %v1157 = vmul.f32 %v1145, %v1149
  %vm1158 = vcmask 130048
  %v1159 = vsel %vm1158, %v1150, 0.0
  %1160 = vadd.xlane.f32.xlu0 %v1159
  %v1161 = vpop.xlane.xlu0 %1160
  %v1162 = vsel %vm1158, %v1151, 0.0
  %1163 = vadd.xlane.f32.xlu0 %v1162
  %v1164 = vpop.xlane.xlu0 %1163
  %v1165 = vsel %vm1158, %v1152, 0.0
  %1166 = vadd.xlane.f32.xlu0 %v1165
  %v1167 = vpop.xlane.xlu0 %1166
  %v1168 = vsel %vm1158, %v1153, 0.0
  %1169 = vadd.xlane.f32.xlu0 %v1168
  %v1170 = vpop.xlane.xlu0 %1169
  %v1171 = vsel %vm1158, %v1154, 0.0
  %1172 = vadd.xlane.f32.xlu0 %v1171
  %v1173 = vpop.xlane.xlu0 %1172
  %v1174 = vsel %vm1158, %v1155, 0.0
  %1175 = vadd.xlane.f32.xlu0 %v1174
  %v1176 = vpop.xlane.xlu0 %1175
  %v1177 = vsel %vm1158, %v1156, 0.0
  %1178 = vadd.xlane.f32.xlu0 %v1177
  %v1179 = vpop.xlane.xlu0 %1178
  %v1180 = vsel %vm1158, %v1157, 0.0
  %1181 = vadd.xlane.f32.xlu0 %v1180
  %v1182 = vpop.xlane.xlu0 %1181
  %v1183 = vlaneseq
  %v1184 = vshrl.u32 %v1183, 7
  %v1185 = vsub.s32 0, %v1184
  %v1186 = vrot.slane %v996, %v1185
  %v1187 = vadd.f32 %v1161, %v1186
  %v1188 = vadd.f32 %v1164, %v1186
  %v1189 = vadd.f32 %v1167, %v1186
  %v1190 = vadd.f32 %v1170, %v1186
  %v1191 = vadd.f32 %v1173, %v1186
  %v1192 = vadd.f32 %v1176, %v1186
  %v1193 = vadd.f32 %v1179, %v1186
  %v1194 = vadd.f32 %v1182, %v1186
  %vm1195 = vcmp.eq.s32.totalorder %v170, 0
  %1197 = vset.pattern.permute.xlu0 0
  %1198 = vperm.xlu0 %1197, %v1187
  %v1199 = vpop.permute.xlu0 %1198
  %v1201 = vsel %vm1195, %v1199, 0.0
  %vm1202 = vcmp.eq.s32.totalorder %v170, 1
  %1204 = vset.pattern.permute.xlu0 0
  %1205 = vperm.xlu0 %1204, %v1188
  %v1206 = vpop.permute.xlu0 %1205
  %v1208 = vsel %vm1202, %v1206, %v1201
  %vm1209 = vcmp.eq.s32.totalorder %v170, 2
  %1211 = vset.pattern.permute.xlu0 0
  %1212 = vperm.xlu0 %1211, %v1189
  %v1213 = vpop.permute.xlu0 %1212
  %v1215 = vsel %vm1209, %v1213, %v1208
  %vm1216 = vcmp.eq.s32.totalorder %v170, 3
  %1218 = vset.pattern.permute.xlu0 0
  %1219 = vperm.xlu0 %1218, %v1190
  %v1220 = vpop.permute.xlu0 %1219
  %v1222 = vsel %vm1216, %v1220, %v1215
  %vm1223 = vcmp.eq.s32.totalorder %v170, 4
  %1225 = vset.pattern.permute.xlu0 0
  %1226 = vperm.xlu0 %1225, %v1191
  %v1227 = vpop.permute.xlu0 %1226
  %v1229 = vsel %vm1223, %v1227, %v1222
  %vm1230 = vcmp.eq.s32.totalorder %v170, 5
  %1232 = vset.pattern.permute.xlu0 0
  %1233 = vperm.xlu0 %1232, %v1192
  %v1234 = vpop.permute.xlu0 %1233
  %v1236 = vsel %vm1230, %v1234, %v1229
  %vm1237 = vcmp.eq.s32.totalorder %v170, 6
  %1239 = vset.pattern.permute.xlu0 0
  %1240 = vperm.xlu0 %1239, %v1193
  %v1241 = vpop.permute.xlu0 %1240
  %v1243 = vsel %vm1237, %v1241, %v1236
  %vm1244 = vcmp.eq.s32.totalorder %v170, 7
  %1246 = vset.pattern.permute.xlu0 0
  %1247 = vperm.xlu0 %1246, %v1194
  %v1248 = vpop.permute.xlu0 %1247
  %v1250 = vsel %vm1244, %v1248, %v1243
  %vm1251 = vcmask 64512
  %1252 = vst.msk [vmem:[%s3] sm:$0xff] %vm1251, %v1250
  // Predicated region
  $region14: #{rnn_base_model_forward.1} parent=0 // pred_check
    _
  $region15: #{rnn_base_model_forward.1} parent=0 // pred_check_branch
    %1254 = sbr.rel (0) target = $region17
  $region16: #{rnn_base_model_forward.1} parent=0 // pred_region
    _
  $region17: #{rnn_base_model_forward.1} parent=0 // pred_fallthru
    _
  // Predicated region
  $region18: #{rnn_base_model_forward.1} parent=0 // pred_check
    _
  $region19: #{rnn_base_model_forward.1} parent=0 // pred_check_branch
    %1256 = sbr.rel (0) target = $region21
  $region20: #{rnn_base_model_forward.1} parent=0 // pred_region
    _
  $region21: #{rnn_base_model_forward.1} parent=0 // pred_fallthru
    _
  // Predicated region
  $region22: #{rnn_base_model_forward.1} parent=0 // pred_check
    _
  $region23: #{rnn_base_model_forward.1} parent=0 // pred_check_branch
    %1258 = sbr.rel (0) target = $region25
  $region24: #{rnn_base_model_forward.1} parent=0 // pred_region
    _
  $region25: #{rnn_base_model_forward.1} parent=0 // pred_fallthru
    _
  // Predicated region
  $region26: #{rnn_base_model_forward.1} parent=0 // pred_check
    _
  $region27: #{rnn_base_model_forward.1} parent=0 // pred_check_branch
    %1260 = sbr.rel (0) target = $region29
  $region28: #{rnn_base_model_forward.1} parent=0 // pred_region
    _
  $region29: #{rnn_base_model_forward.1} parent=0 // pred_fallthru
    _
  // Predicated region
  $region30: #{rnn_base_model_forward.1} parent=0 // pred_check
    _
  $region31: #{rnn_base_model_forward.1} parent=0 // pred_check_branch
    %1262 = sbr.rel (0) target = $region33
  $region32: #{rnn_base_model_forward.1} parent=0 // pred_region
    _
  $region33: #{rnn_base_model_forward.1} parent=0 // pred_fallthru
    _
  // Predicated region
  $region34: #{rnn_base_model_forward.1} parent=0 // pred_check
    _
  $region35: #{rnn_base_model_forward.1} parent=0 // pred_check_branch
    %1264 = sbr.rel (0) target = $region37
  $region36: #{rnn_base_model_forward.1} parent=0 // pred_region
    _
  $region37: #{rnn_base_model_forward.1} parent=0 // pred_fallthru
    _

</llo_original>
